<compile_context>
chip_gen: v5e
topology: v5e:2x2
jax: 0.10.0
libtpu: 0.0.40
codegen_flags: <defaults>
</compile_context>

<pallas_src>
import functools

import jax
import jax.numpy as jnp
from jax import lax
from jax.experimental import pallas as pl
from jax.experimental.pallas import tpu as pltpu


def _round_up(x, m):
    return (x + m - 1) // m * m


def _mxu_k_is_wide():
    """True on TPU generations whose MXU takes a 256-wide contraction (v6e / v7x), where
    the K = C+1 bias-column augmentation is free.  Conservative False otherwise (v5e and
    older are 128-wide in K, so C=128 -> 129 would force a second MXU pass)."""
    try:
        kind = jax.devices()[0].device_kind.lower()
    except Exception:
        return False
    return not any(t in kind for t in ("v2", "v3", "v4", "v5"))


# ----------------------------------------------------------------------------
# VQ kernel: one (Ck, tile_t) slab of tokens (NCHW-native, tokens along lanes).
# ----------------------------------------------------------------------------
def _vq_kernel(*refs, n_e, hw, tile_t, masked, fused_bias, c_dim):
    if fused_bias:
        cb_ref, cbt_ref, z_ref, zq_ref, idx_ref, loss_ref = refs
        bias_ref = None
    else:
        cb_ref, cbt_ref, bias_ref, z_ref, zq_ref, idx_ref, loss_ref = refs

    zc = z_ref[0]                                   # (Ck, T) f32, tokens on lanes
    cb = cb_ref[...]                                # (NE, Ck) f32/bf16 (cast hoisted)

    # score = e.z - 0.5*||e||^2   (||z||^2 dropped: per-token constant, argmin-invariant)
    score = lax.dot_general(cb, zc.astype(cb.dtype),
                            dimension_numbers=(((1,), (0,)), ((), ())),
                            preferred_element_type=jnp.float32)      # (NE, T)
    if bias_ref is not None:                        # non-fused (128-wide-K) path
        score = score + bias_ref[...]               # + (-0.5*||e||^2), lane-broadcast

    # argmax(score) == argmin(d); first occurrence on ties (torch.argmin semantics).
    max_s = jnp.max(score, axis=0, keepdims=True)                    # (1, T)
    row_f = lax.broadcasted_iota(jnp.int32, score.shape, 0).astype(jnp.float32)
    idx_f = jnp.min(jnp.where(score >= max_s, row_f, jnp.float32(n_e)),
                    axis=0, keepdims=True)                            # (1, T) exact ints
    idx_ref[0] = idx_f.astype(jnp.int32)            # lane-dense int32 store (1 sublane)

    # gather codebook rows via a one-hot MXU matmul (0/1 exact in bf16 too).
    cbt = cbt_ref[...]                              # (C, NE)
    onehot = (row_f == idx_f).astype(cbt.dtype)     # (NE, T)
    zq = lax.dot_general(cbt, onehot,
                         dimension_numbers=(((1,), (0,)), ((), ())),
                         preferred_element_type=jnp.float32)          # (C, T)
    zq_ref[0] = zq

    # fused MSE partial sum (drop the constant/zero bias channels; mask padded lanes).
    z_tok = zc[:c_dim] if fused_bias else zc
    sq = (zq - z_tok) * (zq - z_tok)
    if masked:
        lane = lax.broadcasted_iota(jnp.int32, (1, tile_t), 1)
        valid = (pl.program_id(1) * tile_t + lane) < hw
        sq = jnp.where(valid, sq, 0.0)
    part = jnp.sum(jnp.sum(sq, axis=0, keepdims=True), axis=1, keepdims=True)   # (1, 1)
    loss_ref[...] = jnp.broadcast_to(part, (1, 1, 8, 128))


def _vq_quantize_nchw(inputs, *, B, C, n_e, hw, hwp, tile_t, fused_bias):
    num_t = hwp // tile_t
    Ck = inputs[-1].shape[1]                        # channel dim of z slab (C, or padded C+1)
    kern = functools.partial(_vq_kernel, n_e=n_e, hw=hw, tile_t=tile_t,
                             masked=(hw != hwp), fused_bias=fused_bias, c_dim=C)

    # Constant blocks keep the same block index every step, so Pallas does not re-DMA them.
    in_specs = [
        pl.BlockSpec((n_e, Ck), lambda b, t: (0, 0)),      # codebook (+ fused bias column)
        pl.BlockSpec((C, n_e), lambda b, t: (0, 0)),       # codebook^T for the gather
    ]
    if not fused_bias:
        in_specs.append(pl.BlockSpec((n_e, 1), lambda b, t: (0, 0)))   # -0.5*||e||^2
    in_specs.append(pl.BlockSpec((1, Ck, tile_t), lambda b, t: (b, 0, t)))

    return pl.pallas_call(
        kern,
        out_shape=(
            jax.ShapeDtypeStruct((B, C, hwp), jnp.float32),          # z_q (NCHW-flat)
            jax.ShapeDtypeStruct((B, 1, hwp), jnp.int32),            # indices, lane-dense
            jax.ShapeDtypeStruct((B, num_t, 8, 128), jnp.float32),   # per-tile sq-diff sums
        ),
        grid=(B, num_t),
        in_specs=in_specs,
        out_specs=(
            pl.BlockSpec((1, C, tile_t), lambda b, t: (b, 0, t)),
            pl.BlockSpec((1, 1, tile_t), lambda b, t: (b, 0, t)),
            pl.BlockSpec((1, 1, 8, 128), lambda b, t: (b, t, 0, 0)),
        ),
        compiler_params=pltpu.CompilerParams(
            dimension_semantics=("parallel", "parallel"),
            vmem_limit_bytes=48 * 1024 * 1024),
    )(*inputs)


# ----------------------------------------------------------------------------
# Module-equivalent forward (eval mode, use_l2_norm=False default config).
# ----------------------------------------------------------------------------
@functools.partial(jax.jit,
                   static_argnames=("commitment_cost", "tile_t", "distance_in_bf16",
                                    "gather_in_bf16", "fuse_bias"))
def _forward_impl(z, emb_weight, proj_weight, *, commitment_cost, tile_t,
                  distance_in_bf16, gather_in_bf16, fuse_bias):
    B, C, H, W = z.shape
    hw = H * W
    n_e = emb_weight.shape[0]
    z = z.astype(jnp.float32)                      # @autocast(enabled=False)

    # Codebook projection (nn.Linear, no bias) + constants, hoisted to the wrapper.
    codebook = emb_weight.astype(jnp.float32) @ proj_weight.astype(jnp.float32).T   # (NE, C)
    e2 = jnp.sum(codebook * codebook, axis=1, keepdims=True)                        # (NE, 1)
    dist_dtype = jnp.bfloat16 if distance_in_bf16 else jnp.float32
    gath_dtype = jnp.bfloat16 if gather_in_bf16 else jnp.float32
    cbT = codebook.T.astype(gath_dtype)                                             # (C, NE)

    # --- tile selection (tokens along lanes) ---
    if tile_t is None:
        tile = min(2048, _round_up(hw, 128))
    else:
        tile = max(128, min(int(tile_t), _round_up(hw, 128)))
    tile = _round_up(tile, 128)
    if B == 1:                                     # keep >=2 grid programs (v7x: 2 TCs)
        tile = min(tile, max(128, _round_up((hw + 1) // 2, 128)))
    # VMEM budget: ~5 live (NE,T) f32 slabs + ~4 (C,T) slabs stay well under scoped VMEM.
    per_tok_bytes = 5 * n_e * 4 + 4 * (C + 8) * 4
    cap = max(128, (24 * 1024 * 1024 // per_tok_bytes) // 128 * 128)
    tile = min(tile, cap)
    hwp = _round_up(hw, tile)

    z3 = z.reshape(B, C, hw)
    if hwp != hw:
        z3 = jnp.pad(z3, ((0, 0), (0, 0), (0, hwp - hw)))

    if fuse_bias:
        # Fold -0.5*||e||^2 into the matmul: constant-1 channel on z, bias column on the
        # codebook, zero-padded to a multiple of 8 channels (zeros contribute nothing).
        Ck = _round_up(C + 1, 8)
        cb_aug = jnp.concatenate(
            [codebook, -0.5 * e2, jnp.zeros((n_e, Ck - C - 1), jnp.float32)], axis=1)
        z_aug = jnp.concatenate(
            [z3, jnp.ones((B, 1, hwp), jnp.float32),
             jnp.zeros((B, Ck - C - 1, hwp), jnp.float32)], axis=1)
        inputs = (cb_aug.astype(dist_dtype), cbT, z_aug)
    else:
        inputs = (codebook.astype(dist_dtype), cbT, -0.5 * e2, z3)

    zq3, idx_full, loss_part = _vq_quantize_nchw(
        inputs, B=B, C=C, n_e=n_e, hw=hw, hwp=hwp, tile_t=tile, fused_bias=fuse_bias)

    if hwp != hw:
        zq3 = zq3[:, :, :hw]
    z_quantized = zq3.reshape(B, C, H, W)          # already NCHW, no transposes anywhere
    idx = idx_full[:, 0, :hw].reshape(B, H, W)

    # mean((z_q - z)^2), accumulated inside the kernel (z_q / z never re-read from HBM).
    diff2 = jnp.sum(loss_part[:, :, 0, 0]) / jnp.float32(B * hw * C)
    commitment_loss = jnp.float32(commitment_cost) * diff2
    codebook_loss = diff2
    loss = commitment_loss + codebook_loss

    # Eval forward: z + (z_q - z).detach() is a value identity, so z_q is returned directly.
    # TODO(synk): training-only branches (token_noise_prob RNG, diversity_loss) and the
    # use_l2_norm=True path are not part of this eval forward.
    result = dict(
        quantizer_loss=loss,
        commitment_loss=commitment_loss,
        codebook_loss=codebook_loss,
        min_encoding_indices=idx,
    )
    return z_quantized, result


def vector_quantizer_forward(z, emb_weight, proj_weight, commitment_cost=0.25,
                             tile_t=None, distance_in_bf16=True, gather_in_bf16=False,
                             fuse_bias=None):
    if fuse_bias is None:
        fuse_bias = _mxu_k_is_wide()
    return _forward_impl(z, emb_weight, proj_weight,
                         commitment_cost=float(commitment_cost),
                         tile_t=tile_t,
                         distance_in_bf16=bool(distance_in_bf16),
                         gather_in_bf16=bool(gather_in_bf16),
                         fuse_bias=bool(fuse_bias))


if __name__ == "__main__":
    codebook_size = 256     # n_e
    token_size = 128        # e_dim == channel dim C
    B = 2

    key = jax.random.PRNGKey(0)
    k_emb, k_w, k_z = jax.random.split(key, 3)

    emb_weight = jax.random.uniform(
        k_emb, (codebook_size, token_size),
        minval=-1.0 / codebook_size, maxval=1.0 / codebook_size, dtype=jnp.float32)
    bound = 1.0 / (token_size ** 0.5)               # nn.Linear default-style init
    proj_weight = jax.random.uniform(
        k_w, (token_size, token_size), minval=-bound, maxval=bound, dtype=jnp.float32)

    def reference(x):
        Bc, Cc, Hc, Wc = x.shape
        cb = emb_weight @ proj_weight.T
        z_flat = jnp.transpose(x, (0, 2, 3, 1)).reshape(-1, Cc)
        d = (jnp.sum(z_flat ** 2, 1, keepdims=True) + jnp.sum(cb ** 2, 1)
             - 2.0 * z_flat @ cb.T)
        i = jnp.argmin(d, axis=1).astype(jnp.int32)
        zq = cb[i]
        diff2 = jnp.mean((zq - z_flat) ** 2)
        zq_nchw = jnp.transpose(zq.reshape(Bc, Hc, Wc, Cc), (0, 3, 1, 2))
        return zq_nchw, i.reshape(Bc, Hc, Wc), diff2

    # (10,10): exercises padding+masking; (16,16): aligned path.
    for (H, W) in [(10, 10), (16, 16)]:
        kx = jax.random.fold_in(k_z, H)
        x = jax.random.normal(kx, (B, token_size, H, W), dtype=jnp.float32)
        zq_expected, idx_expected, diff2_expected = reference(x)

        # Exact path (f32 distances + f32 gather): bitwise argmin / z_q vs reference.
        z_q, results = vector_quantizer_forward(x, emb_weight, proj_weight,
                                                distance_in_bf16=False,
                                                gather_in_bf16=False)
        jax.block_until_ready(z_q)
        jax.block_until_ready(results["quantizer_loss"])
        assert jnp.array_equal(results["min_encoding_indices"], idx_expected), "index mismatch"
        assert jnp.allclose(z_q, zq_expected, atol=1e-5, rtol=1e-5), "z_q mismatch"
        assert jnp.allclose(results["codebook_loss"], diff2_expected,
                            atol=1e-5, rtol=1e-4), "loss mismatch"
        assert jnp.allclose(results["quantizer_loss"], 1.25 * diff2_expected,
                            atol=1e-5, rtol=1e-4), "total loss mismatch"

        # Fast default path (bf16 distance matmul): runs clean; near-ties may flip a few
        # indices vs the f32 reference, so check only that it is rare and loss is close.
        z_q_fast, results_fast = vector_quantizer_forward(x, emb_weight, proj_weight)
        jax.block_until_ready(z_q_fast)
        assert z_q_fast.shape == x.shape
        mism = float(jnp.mean(
            (results_fast["min_encoding_indices"] != idx_expected).astype(jnp.float32)))
        assert mism < 0.10, f"too many bf16 near-tie index flips: {mism}"
        assert jnp.allclose(results_fast["codebook_loss"], diff2_expected,
                            rtol=5e-2, atol=1e-5), "bf16 path loss drifted"

    print("KERNEL_OK")
</pallas_src>

<mosaic_0001>
module attributes {stable_mosaic.version = 11 : i64} {
  func.func @_vq_kernel(%arg0: i32, %arg1: i32, %arg2: memref<256x136xf32, #tpu.memory_space<vmem>>, %arg3: memref<128x256xf32, #tpu.memory_space<vmem>>, %arg4: memref<1x136x128xf32, #tpu.memory_space<vmem>>, %arg5: memref<1x128x128xf32, #tpu.memory_space<vmem>>, %arg6: memref<1x1x128xi32, #tpu.memory_space<vmem>>, %arg7: memref<1x1x8x128xf32, #tpu.memory_space<vmem>>) attributes {dimension_semantics = [#tpu.dimension_semantics<parallel>, #tpu.dimension_semantics<parallel>], iteration_bounds = array<i64: 2, 1>, scalar_prefetch = 0 : i64, scratch_operands = 0 : i64, tpu.core_type = #tpu.core_type<tc>, window_params = [{pipeline_mode = #tpu.pipeline_mode<synchronous>, transform_indices = @transform_0, window_bounds = array<i64: 256, 136>}, {pipeline_mode = #tpu.pipeline_mode<synchronous>, transform_indices = @transform_1, window_bounds = array<i64: 128, 256>}, {transform_indices = @transform_2, window_bounds = array<i64: 1, 136, 128>}, {transform_indices = @transform_3, window_bounds = array<i64: 1, 128, 128>}, {transform_indices = @transform_4, window_bounds = array<i64: 1, 1, 128>}, {transform_indices = @transform_5, window_bounds = array<i64: 1, 1, 8, 128>}]} {
    %c0 = arith.constant 0 : index
    %c0_0 = arith.constant 0 : index
    %c0_1 = arith.constant 0 : index
    %0 = vector.load %arg4[%c0, %c0_0, %c0_1] : memref<1x136x128xf32, #tpu.memory_space<vmem>>, vector<1x136x128xf32>
    %1 = vector.shape_cast %0 : vector<1x136x128xf32> to vector<136x128xf32>
    %c0_2 = arith.constant 0 : index
    %c0_3 = arith.constant 0 : index
    %2 = vector.load %arg2[%c0_2, %c0_3] : memref<256x136xf32, #tpu.memory_space<vmem>>, vector<256x136xf32>
    %cst = arith.constant dense<0.000000e+00> : vector<256x128xf32>
    %3 = tpu.matmul %2, %1, %cst {dimension_numbers = #tpu.dot_dimension_numbers<[1], [0], [0], [1], [0, 0, 1, 1], [], []>} : vector<256x136xf32>, vector<136x128xf32>, vector<256x128xf32> -> vector<256x128xf32>
    %cst_4 = arith.constant dense<0xFF800000> : vector<128xf32>
    %4 = vector.multi_reduction <maximumf>, %3, %cst_4 [0] : vector<256x128xf32> to vector<128xf32>
    %5 = vector.shape_cast %4 : vector<128xf32> to vector<1x128xf32>
    %6 = tpu.iota {dimensions = array<i32: 0>} : vector<256x128xi32>
    %7 = arith.sitofp %6 : vector<256x128xi32> to vector<256x128xf32>
    %8 = vector.broadcast %5 : vector<1x128xf32> to vector<256x128xf32>
    %9 = arith.cmpf oge, %3, %8 : vector<256x128xf32>
    %cst_5 = arith.constant 2.560000e+02 : f32
    %10 = vector.broadcast %cst_5 : f32 to vector<256x128xf32>
    %11 = arith.select %9, %7, %10 : vector<256x128xi1>, vector<256x128xf32>
    %cst_6 = arith.constant dense<0x7F800000> : vector<128xf32>
    %12 = vector.multi_reduction <minimumf>, %11, %cst_6 [0] : vector<256x128xf32> to vector<128xf32>
    %13 = vector.shape_cast %12 : vector<128xf32> to vector<1x128xf32>
    %14 = arith.fptosi %13 : vector<1x128xf32> to vector<1x128xi32>
    %c0_7 = arith.constant 0 : index
    %c0_8 = arith.constant 0 : index
    %c0_9 = arith.constant 0 : index
    %15 = vector.load %arg6[%c0_7, %c0_8, %c0_9] : memref<1x1x128xi32, #tpu.memory_space<vmem>>, vector<1x1x128xi32>
    %16 = vector.shape_cast %15 : vector<1x1x128xi32> to vector<1x128xi32>
    %17 = vector.shape_cast %14 : vector<1x128xi32> to vector<1x1x128xi32>
    tpu.vector_store %arg6[%c0_7, %c0_8, %c0_9], %17 {strides = array<i32>} : memref<1x1x128xi32, #tpu.memory_space<vmem>>, vector<1x1x128xi32>,
    %c0_10 = arith.constant 0 : index
    %c0_11 = arith.constant 0 : index
    %18 = vector.load %arg3[%c0_10, %c0_11] : memref<128x256xf32, #tpu.memory_space<vmem>>, vector<128x256xf32>
    %19 = vector.broadcast %13 : vector<1x128xf32> to vector<256x128xf32>
    %20 = arith.cmpf oeq, %7, %19 : vector<256x128xf32>
    %21 = arith.extui %20 : vector<256x128xi1> to vector<256x128xi32>
    %22 = arith.sitofp %21 : vector<256x128xi32> to vector<256x128xf32>
    %cst_12 = arith.constant dense<0.000000e+00> : vector<128x128xf32>
    %23 = tpu.matmul %18, %22, %cst_12 {dimension_numbers = #tpu.dot_dimension_numbers<[1], [0], [0], [1], [0, 0, 1, 1], [], []>} : vector<128x256xf32>, vector<256x128xf32>, vector<128x128xf32> -> vector<128x128xf32>
    %c0_13 = arith.constant 0 : index
    %c0_14 = arith.constant 0 : index
    %c0_15 = arith.constant 0 : index
    %24 = vector.load %arg5[%c0_13, %c0_14, %c0_15] : memref<1x128x128xf32, #tpu.memory_space<vmem>>, vector<1x128x128xf32>
    %25 = vector.shape_cast %24 : vector<1x128x128xf32> to vector<128x128xf32>
    %26 = vector.shape_cast %23 : vector<128x128xf32> to vector<1x128x128xf32>
    tpu.vector_store %arg5[%c0_13, %c0_14, %c0_15], %26 {strides = array<i32>} : memref<1x128x128xf32, #tpu.memory_space<vmem>>, vector<1x128x128xf32>,
    %27 = vector.extract_strided_slice %1 {offsets = [0, 0], sizes = [128, 128], strides = [1, 1]} : vector<136x128xf32> to vector<128x128xf32>
    %28 = arith.subf %23, %27 : vector<128x128xf32>
    %29 = arith.subf %23, %27 : vector<128x128xf32>
    %30 = arith.mulf %28, %29 : vector<128x128xf32>
    %31 = tpu.iota {dimensions = array<i32: 1>} : vector<1x128xi32>
    %c128_i32 = arith.constant 128 : i32
    %32 = arith.muli %arg1, %c128_i32 : i32
    %33 = vector.broadcast %32 : i32 to vector<1x128xi32>
    %34 = arith.addi %33, %31 : vector<1x128xi32>
    %c100_i32 = arith.constant 100 : i32
    %35 = vector.broadcast %c100_i32 : i32 to vector<1x128xi32>
    %36 = arith.cmpi slt, %34, %35 : vector<1x128xi32>
    %cst_16 = arith.constant 0.000000e+00 : f32
    %37 = vector.shape_cast %36 : vector<1x128xi1> to vector<1x128xi1>
    %38 = vector.broadcast %37 : vector<1x128xi1> to vector<128x128xi1>
    %39 = vector.broadcast %cst_16 : f32 to vector<128x128xf32>
    %40 = arith.select %38, %30, %39 : vector<128x128xi1>, vector<128x128xf32>
    %cst_17 = arith.constant dense<0.000000e+00> : vector<128xf32>
    %41 = vector.multi_reduction <add>, %40, %cst_17 [0] : vector<128x128xf32> to vector<128xf32>
    %42 = vector.shape_cast %41 : vector<128xf32> to vector<1x128xf32>
    %cst_18 = arith.constant dense<0.000000e+00> : vector<1xf32>
    %43 = vector.multi_reduction <add>, %42, %cst_18 [1] : vector<1x128xf32> to vector<1xf32>
    %44 = vector.shape_cast %43 : vector<1xf32> to vector<1x1xf32>
    %45 = vector.shape_cast %44 : vector<1x1xf32> to vector<1x1x1x1xf32>
    %46 = vector.broadcast %45 : vector<1x1x1x1xf32> to vector<1x1x8x128xf32>
    %c0_19 = arith.constant 0 : index
    %c0_20 = arith.constant 0 : index
    %c0_21 = arith.constant 0 : index
    %c0_22 = arith.constant 0 : index
    %47 = vector.load %arg7[%c0_19, %c0_20, %c0_21, %c0_22] : memref<1x1x8x128xf32, #tpu.memory_space<vmem>>, vector<1x1x8x128xf32>
    tpu.vector_store %arg7[%c0_19, %c0_20, %c0_21, %c0_22], %46 {strides = array<i32>} : memref<1x1x8x128xf32, #tpu.memory_space<vmem>>, vector<1x1x8x128xf32>,
    return
  }
  func.func @transform_0(%arg0: i32, %arg1: i32) -> (i32, i32) {
    %c0_i32 = arith.constant 0 : i32
    %c0_i32_0 = arith.constant 0 : i32
    %c0_i32_1 = arith.constant 0 : i32
    return %c0_i32, %c0_i32_0 : i32, i32
  }
  func.func @transform_1(%arg0: i32, %arg1: i32) -> (i32, i32) {
    %c0_i32 = arith.constant 0 : i32
    %c0_i32_0 = arith.constant 0 : i32
    %c0_i32_1 = arith.constant 0 : i32
    return %c0_i32, %c0_i32_0 : i32, i32
  }
  func.func @transform_2(%arg0: i32, %arg1: i32) -> (i32, i32, i32) {
    %c0_i32 = arith.constant 0 : i32
    %c0_i32_0 = arith.constant 0 : i32
    return %arg0, %c0_i32, %arg1 : i32, i32, i32
  }
  func.func @transform_3(%arg0: i32, %arg1: i32) -> (i32, i32, i32) {
    %c0_i32 = arith.constant 0 : i32
    %c0_i32_0 = arith.constant 0 : i32
    return %arg0, %c0_i32, %arg1 : i32, i32, i32
  }
  func.func @transform_4(%arg0: i32, %arg1: i32) -> (i32, i32, i32) {
    %c0_i32 = arith.constant 0 : i32
    %c0_i32_0 = arith.constant 0 : i32
    return %arg0, %c0_i32, %arg1 : i32, i32, i32
  }
  func.func @transform_5(%arg0: i32, %arg1: i32) -> (i32, i32, i32, i32) {
    %c0_i32 = arith.constant 0 : i32
    %c0_i32_0 = arith.constant 0 : i32
    %c0_i32_1 = arith.constant 0 : i32
    return %arg0, %arg1, %c0_i32, %c0_i32_0 : i32, i32, i32, i32
  }
}

</mosaic_0001>

<llo_original>
// kernel: squeeze.2
$region0: #{squeeze.2}
  %s0 = inlined_call_operand.vmem [shape: s32[2,100], index: 0, kind: input, shape index: {}]
  %s1 = inlined_call_operand.vmem [shape: s32[2,10,10], index: 1, kind: output, shape index: {}]
  $region1: #{squeeze.2} parent=0
    #allocation0 [shape = 'u8[4096]{0}', space=vmem, size = 0x1000, scoped, tag = 'scoped mem for input reshape']
    %s3 = ssub.s32 4, 1
    %v4 = vld [vmem:[%s0] sm:%s3]
    %5 = vst [vmem:[#allocation0] sm:%s3] %v4
    %v6 = vld [vmem:[#allocation0] sm:$0x3]
    %vm7 = vcmask 80896
    %8 = vst.msk [vmem:[%s1] ss:$16 sm:$0x3] %vm7, %v6
    %v9 = vld [vmem:[#allocation0] sm:$0x3]
    %10 = vrot.lane.b32.xlu0 %v9, 118
    %v11 = vpop.permute.xlu0 %10
    %vm12 = vcmask 80896
    %s13 = scalar_lea.vmem %s1, 1
    %14 = vst.msk [vmem:[%s13] ss:$16 sm:$0x3] %vm12, %v11
    %v15 = vld [vmem:[#allocation0] sm:$0x3]
    %16 = vrot.lane.b32.xlu0 %v15, 108
    %v17 = vpop.permute.xlu0 %16
    %vm18 = vcmask 80896
    %s19 = scalar_lea.vmem %s1, 2
    %20 = vst.msk [vmem:[%s19] ss:$16 sm:$0x3] %vm18, %v17
    %v21 = vld [vmem:[#allocation0] sm:$0x3]
    %22 = vrot.lane.b32.xlu0 %v21, 98
    %v23 = vpop.permute.xlu0 %22
    %vm24 = vcmask 80896
    %s25 = scalar_lea.vmem %s1, 3
    %26 = vst.msk [vmem:[%s25] ss:$16 sm:$0x3] %vm24, %v23
    %v27 = vld [vmem:[#allocation0] sm:$0x3]
    %28 = vrot.lane.b32.xlu0 %v27, 88
    %v29 = vpop.permute.xlu0 %28
    %vm30 = vcmask 80896
    %s31 = scalar_lea.vmem %s1, 4
    %32 = vst.msk [vmem:[%s31] ss:$16 sm:$0x3] %vm30, %v29
    %v33 = vld [vmem:[#allocation0] sm:$0x3]
    %34 = vrot.lane.b32.xlu0 %v33, 78
    %v35 = vpop.permute.xlu0 %34
    %vm36 = vcmask 80896
    %s37 = scalar_lea.vmem %s1, 5
    %38 = vst.msk [vmem:[%s37] ss:$16 sm:$0x3] %vm36, %v35
    %v39 = vld [vmem:[#allocation0] sm:$0x3]
    %40 = vrot.lane.b32.xlu0 %v39, 68
    %v41 = vpop.permute.xlu0 %40
    %vm42 = vcmask 80896
    %s43 = scalar_lea.vmem %s1, 6
    %44 = vst.msk [vmem:[%s43] ss:$16 sm:$0x3] %vm42, %v41
    %v45 = vld [vmem:[#allocation0] sm:$0x3]
    %46 = vrot.lane.b32.xlu0 %v45, 58
    %v47 = vpop.permute.xlu0 %46
    %vm48 = vcmask 80896
    %s49 = scalar_lea.vmem %s1, 7
    %50 = vst.msk [vmem:[%s49] ss:$16 sm:$0x3] %vm48, %v47
    %v51 = vld [vmem:[#allocation0] sm:$0x3]
    %52 = vrot.lane.b32.xlu0 %v51, 48
    %v53 = vpop.permute.xlu0 %52
    %vm54 = vcmask 80896
    %s55 = scalar_lea.vmem %s1, 8
    %56 = vst.msk [vmem:[%s55] ss:$16 sm:$0x3] %vm54, %v53
    %v57 = vld [vmem:[#allocation0] sm:$0x3]
    %58 = vrot.lane.b32.xlu0 %v57, 38
    %v59 = vpop.permute.xlu0 %58
    %vm60 = vcmask 80896
    %s61 = scalar_lea.vmem %s1, 9
    %62 = vst.msk [vmem:[%s61] ss:$16 sm:$0x3] %vm60, %v59

// kernel: _forward_impl.1
$region0: #{_forward_impl.1}
  #allocation0 [shape = 'u32[]', space=smem, size = 0x4, offset = 0x4, fixed_abs, tag = 'smem constant byte address 0x4 - core index']
  #allocation1 [shape = 'u32[72,128]{1,0:T(1,128)}', space=vmem, size = 0x9000, scoped, tag = 'internal scratch']
  %s0 = inlined_call_operand.vmem [shape: f32[256,136], index: 0, kind: input, shape index: {}]
  %s1 = inlined_call_operand.vmem [shape: f32[128,256], index: 1, kind: input, shape index: {}]
  %s2 = inlined_call_operand.vmem [shape: f32[2,136,128], index: 2, kind: input, shape index: {}]
  %s3 = inlined_call_operand.vmem [shape: f32[2,128,128], index: 3, kind: output, shape index: {0}]
  %s4 = inlined_call_operand.vmem [shape: s32[2,1,128], index: 4, kind: output, shape index: {1}]
  %s5 = inlined_call_operand.vmem [shape: f32[2,1,8,128], index: 5, kind: output, shape index: {2}]
  %6 = xla_tuple %s3, %s4, %s5
  %s7 = sld [smem:[#allocation0]]
  $region61: #{_forward_impl.1} parent=0
    _
  %s9 = ssub.s32 1, %s7
  %s10 = scalar_select 0, %s9, %s7
  loop: start=0, step=1, limit=4
  $region2: #{_forward_impl.1} parent=0 // loop_pre_header
    _
  $region3: #{_forward_impl.1} parent=0 // loop_header
    %s12 = sphi 0, %s16
    %p13 = scmp.ge.s32.totalorder %s12, 4
    %s19 = sphi 0, %s31
    %s20 = sphi 0, %s27
    %s21 = sphi 0, %s19
    %s22 = sphi 0, %s20
    %s23 = sphi 0, %s21
    %s24 = sphi 0, %s22
    %s32 = sphi 0, %s32
    %s34 = sphi 0, %s32
    %s35 = sphi 0, %s34
    %s49 = sphi 0, %s35
    %s53 = sphi 0, %s53
    %s55 = sphi 0, %s53
    %s56 = sphi 0, %s55
    %s70 = sphi 0, %s56
    %s78 = sphi 0, %s80
    %s81 = sphi 0, %s78
    %s82 = sphi 0, %s81
    %s98 = sphi 0, %s82
    %s106 = sphi 0, %s108
    %s109 = sphi 0, %s106
    %s110 = sphi 0, %s109
    %s126 = sphi 0, %s110
    %s134 = sphi 0, %s136
    %s137 = sphi 0, %s134
    %s138 = sphi 0, %s137
    %s154 = sphi 0, %s138
    %s162 = sphi 0, %s164
    %s165 = sphi 0, %s162
    %s166 = sphi 0, %s165
    %s182 = sphi 0, %s166
  $region4: #{_forward_impl.1} parent=0 // loop_header_branch
    %15 = sbr.rel (%p13) target = $region8
  $region5: #{_forward_impl.1} parent=0 // loop_body
    %s17 = ssub.s32 %s12, 1
    %s18 = ssub.s32 %s12, 2
    %s25 = sadd.s32 1, %s20
    %p26 = scmp.ge.s32.totalorder %s25, 1
    %s27 = scalar_select %p26, 0, %s25
    %s28 = sadd.s32 1, %s19
    %s29 = scalar_select %p26, %s28, %s19
    %p30 = scmp.ge.s32.totalorder %s29, 2
    %s31 = scalar_select %p30, 0, %s29
    %s33 = sadd.s32 %s32, 1
    %p36 = scmp.eq.s32.totalorder %s12, 1
    %p37 = scmp.ne.s32.totalorder %s32, %s34
    %p38 = scmp.eq.s32.totalorder %s12, 0
    %p39 = por %p37, %p38
    %p40 = scmp.ne.s32.totalorder %s32, %s34
    %p41 = scmp.eq.s32.totalorder %s17, 1
    %p42 = por %p40, %p41
    %p43 = scmp.ne.s32.totalorder %s34, %s35
    %p44 = scmp.eq.s32.totalorder %s17, 0
    %p45 = por %p43, %p44
    %p46 = scmp.ne.s32.totalorder %s34, %s35
    %p47 = scmp.eq.s32.totalorder %s18, 1
    %p48 = por %p46, %p47
    %p50 = scmp.ne.s32.totalorder %s35, %s49
    %p51 = scmp.eq.s32.totalorder %s18, 0
    %p52 = por %p50, %p51
    %s54 = sadd.s32 %s53, 1
    %p57 = scmp.eq.s32.totalorder %s12, 1
    %p58 = scmp.ne.s32.totalorder %s53, %s55
    %p59 = scmp.eq.s32.totalorder %s12, 0
    %p60 = por %p58, %p59
    %p61 = scmp.ne.s32.totalorder %s53, %s55
    %p62 = scmp.eq.s32.totalorder %s17, 1
    %p63 = por %p61, %p62
    %p64 = scmp.ne.s32.totalorder %s55, %s56
    %p65 = scmp.eq.s32.totalorder %s17, 0
    %p66 = por %p64, %p65
    %p67 = scmp.ne.s32.totalorder %s55, %s56
    %p68 = scmp.eq.s32.totalorder %s18, 1
    %p69 = por %p67, %p68
    %p71 = scmp.ne.s32.totalorder %s56, %s70
    %p72 = scmp.eq.s32.totalorder %s18, 0
    %p73 = por %p71, %p72
    %s74 = ssub.s32 %s19, %s31
    %s75 = ssub.s32 %s20, %s27
    %s76 = sor.u32 %s74, %s75
    %p77 = scmp.eq.s32.totalorder %s76, 0
    %s79 = sadd.s32 %s78, 1
    %s80 = scalar_select %p77, %s78, %s79
    %p83 = pneg %p77
    %p84 = scmp.eq.s32.totalorder %s12, 1
    %p85 = por %p83, %p84
    %p86 = scmp.ne.s32.totalorder %s78, %s81
    %p87 = scmp.eq.s32.totalorder %s12, 0
    %p88 = por %p86, %p87
    %p89 = scmp.ne.s32.totalorder %s78, %s81
    %p90 = scmp.eq.s32.totalorder %s17, 1
    %p91 = por %p89, %p90
    %p92 = scmp.ne.s32.totalorder %s81, %s82
    %p93 = scmp.eq.s32.totalorder %s17, 0
    %p94 = por %p92, %p93
    %p95 = scmp.ne.s32.totalorder %s81, %s82
    %p96 = scmp.eq.s32.totalorder %s18, 1
    %p97 = por %p95, %p96
    %p99 = scmp.ne.s32.totalorder %s82, %s98
    %p100 = scmp.eq.s32.totalorder %s18, 0
    %p101 = por %p99, %p100
    %s102 = ssub.s32 %s19, %s31
    %s103 = ssub.s32 %s20, %s27
    %s104 = sor.u32 %s102, %s103
    %p105 = scmp.eq.s32.totalorder %s104, 0
    %s107 = sadd.s32 %s106, 1
    %s108 = scalar_select %p105, %s106, %s107
    %p111 = pneg %p105
    %p112 = scmp.eq.s32.totalorder %s12, 1
    %p113 = por %p111, %p112
    %p114 = scmp.ne.s32.totalorder %s106, %s109
    %p115 = scmp.eq.s32.totalorder %s12, 0
    %p116 = por %p114, %p115
    %p117 = scmp.ne.s32.totalorder %s106, %s109
    %p118 = scmp.eq.s32.totalorder %s17, 1
    %p119 = por %p117, %p118
    %p120 = scmp.ne.s32.totalorder %s109, %s110
    %p121 = scmp.eq.s32.totalorder %s17, 0
    %p122 = por %p120, %p121
    %p123 = scmp.ne.s32.totalorder %s109, %s110
    %p124 = scmp.eq.s32.totalorder %s18, 1
    %p125 = por %p123, %p124
    %p127 = scmp.ne.s32.totalorder %s110, %s126
    %p128 = scmp.eq.s32.totalorder %s18, 0
    %p129 = por %p127, %p128
    %s130 = ssub.s32 %s19, %s31
    %s131 = ssub.s32 %s20, %s27
    %s132 = sor.u32 %s130, %s131
    %p133 = scmp.eq.s32.totalorder %s132, 0
    %s135 = sadd.s32 %s134, 1
    %s136 = scalar_select %p133, %s134, %s135
    %p139 = pneg %p133
    %p140 = scmp.eq.s32.totalorder %s12, 1
    %p141 = por %p139, %p140
    %p142 = scmp.ne.s32.totalorder %s134, %s137
    %p143 = scmp.eq.s32.totalorder %s12, 0
    %p144 = por %p142, %p143
    %p145 = scmp.ne.s32.totalorder %s134, %s137
    %p146 = scmp.eq.s32.totalorder %s17, 1
    %p147 = por %p145, %p146
    %p148 = scmp.ne.s32.totalorder %s137, %s138
    %p149 = scmp.eq.s32.totalorder %s17, 0
    %p150 = por %p148, %p149
    %p151 = scmp.ne.s32.totalorder %s137, %s138
    %p152 = scmp.eq.s32.totalorder %s18, 1
    %p153 = por %p151, %p152
    %p155 = scmp.ne.s32.totalorder %s138, %s154
    %p156 = scmp.eq.s32.totalorder %s18, 0
    %p157 = por %p155, %p156
    %s158 = ssub.s32 %s19, %s31
    %s159 = ssub.s32 %s20, %s27
    %s160 = sor.u32 %s158, %s159
    %p161 = scmp.eq.s32.totalorder %s160, 0
    %s163 = sadd.s32 %s162, 1
    %s164 = scalar_select %p161, %s162, %s163
    %p167 = pneg %p161
    %p168 = scmp.eq.s32.totalorder %s12, 1
    %p169 = por %p167, %p168
    %p170 = scmp.ne.s32.totalorder %s162, %s165
    %p171 = scmp.eq.s32.totalorder %s12, 0
    %p172 = por %p170, %p171
    %p173 = scmp.ne.s32.totalorder %s162, %s165
    %p174 = scmp.eq.s32.totalorder %s17, 1
    %p175 = por %p173, %p174
    %p176 = scmp.ne.s32.totalorder %s165, %s166
    %p177 = scmp.eq.s32.totalorder %s17, 0
    %p178 = por %p176, %p177
    %p179 = scmp.ne.s32.totalorder %s165, %s166
    %p180 = scmp.eq.s32.totalorder %s18, 1
    %p181 = por %p179, %p180
    %p183 = scmp.ne.s32.totalorder %s166, %s182
    %p184 = scmp.eq.s32.totalorder %s18, 0
    %p185 = por %p183, %p184
    %p186 = scmp.le.s32.totalorder 1, %s12
    %p187 = scmp.lt.s32.totalorder %s12, 3
    %p188 = pnand %p186, %p187
    %p189 = pneg %p188
    // Predicated region
    $region9: #{_forward_impl.1} parent=5 // pred_check
      _
    $region10: #{_forward_impl.1} parent=5 // pred_check_branch
      %191 = sbr.rel (%p188) target = $region12
    $region11: #{_forward_impl.1} parent=5 // pred_region
      %s192 = ssub.s32 %s12, 1
      // Predicated region
      $region13: #{_forward_impl.1} parent=11 // pred_check
        %p193 = pneg %p45
      $region14: #{_forward_impl.1} parent=11 // pred_check_branch
        %195 = sbr.rel (%p193) target = $region16
      $region15: #{_forward_impl.1} parent=11 // pred_region
        _
      $region16: #{_forward_impl.1} parent=11 // pred_fallthru
        _
      // Predicated region
      $region17: #{_forward_impl.1} parent=11 // pred_check
        %p196 = pneg %p66
      $region18: #{_forward_impl.1} parent=11 // pred_check_branch
        %198 = sbr.rel (%p196) target = $region20
      $region19: #{_forward_impl.1} parent=11 // pred_region
        _
      $region20: #{_forward_impl.1} parent=11 // pred_fallthru
        _
    $region12: #{_forward_impl.1} parent=5 // pred_fallthru
      _
    %p199 = scmp.lt.s32.totalorder %s12, 2
    // Predicated region
    $region21: #{_forward_impl.1} parent=5 // pred_check
      %p200 = pneg %p199
    $region22: #{_forward_impl.1} parent=5 // pred_check_branch
      %202 = sbr.rel (%p200) target = $region24
    $region23: #{_forward_impl.1} parent=5 // pred_region
      // Predicated region
      $region25: #{_forward_impl.1} parent=23 // pred_check
        %p203 = pneg %p88
      $region26: #{_forward_impl.1} parent=23 // pred_check_branch
        %205 = sbr.rel (%p203) target = $region28
      $region27: #{_forward_impl.1} parent=23 // pred_region
        %p206 = scmp.lt.s32.totalorder %s19, 1
        %s207 = scalar_select %p206, %s19, 1
        %p208 = scmp.lt.s32.totalorder %s20, 0
        %s209 = scalar_select %p208, %s20, 0
        %s210 = smul.addr %s207, 17
        %s211 = sadd.s32 %s209, %s210
        %s212 = smul.addr %s211, 8
        %s213 = scalar_lea.vmem %s2, %s212
      $region28: #{_forward_impl.1} parent=23 // pred_fallthru
        _
    $region24: #{_forward_impl.1} parent=5 // pred_fallthru
      _
    %p214 = scmp.le.s32.totalorder 1, %s12
    %p215 = scmp.lt.s32.totalorder %s12, 3
    %p216 = pnand %p214, %p215
    %p217 = pneg %p216
    // Predicated region
    $region29: #{_forward_impl.1} parent=5 // pred_check
      _
    $region30: #{_forward_impl.1} parent=5 // pred_check_branch
      %219 = sbr.rel (%p216) target = $region32
    $region31: #{_forward_impl.1} parent=5 // pred_region
      %s220 = ssub.s32 %s12, 1
      %p221 = pneg %p45
      %p222 = pneg %p42
      %p223 = pneg %p66
      %p224 = pneg %p63
      %p225 = scmp.lt.s32.totalorder %s21, 1
      %s226 = scalar_select %p225, %s21, 1
      %p227 = scmp.lt.s32.totalorder %s22, 0
      %s228 = scalar_select %p227, %s22, 0
      %s229 = smul.addr %s226, 17
      %s230 = sadd.s32 %s228, %s229
      %s231 = smul.addr %s230, 8
      %s232 = scalar_lea.vmem %s2, %s231
      %p233 = pneg %p94
      %p234 = pneg %p91
      %p235 = pneg %p122
      %p236 = pneg %p119
      %p237 = scmp.lt.s32.totalorder %s21, 1
      %s238 = scalar_select %p237, %s21, 1
      %p239 = scmp.lt.s32.totalorder %s22, 0
      %s240 = scalar_select %p239, %s22, 0
      %s241 = smul.addr %s238, 16
      %s242 = sadd.s32 %s240, %s241
      %s243 = smul.addr %s242, 8
      %s244 = scalar_lea.vmem %s3, %s243
      %p245 = pneg %p150
      %p246 = pneg %p147
      %p247 = scmp.lt.s32.totalorder %s21, 1
      %s248 = scalar_select %p247, %s21, 1
      %p249 = scmp.lt.s32.totalorder %s22, 0
      %s250 = scalar_select %p249, %s22, 0
      %s251 = sadd.s32 %s250, %s248
      %s252 = scalar_lea.vmem %s4, %s251
      %p253 = pneg %p178
      %p254 = pneg %p175
      %p255 = scmp.lt.s32.totalorder %s21, 1
      %s256 = scalar_select %p255, %s21, 1
      %p257 = scmp.lt.s32.totalorder %s22, 0
      %s258 = scalar_select %p257, %s22, 0
      %s259 = sadd.s32 %s258, %s256
      %s260 = smul.addr %s259, 8
      %s261 = scalar_lea.vmem %s5, %s260
      %p262 = scmp.lt.s32.totalorder %s21, 1
      %s263 = scalar_select %p262, %s21, 1
      %p264 = scmp.lt.s32.totalorder %s22, 0
      %s265 = scalar_select %p264, %s22, 0
      %s266 = smul.addr %s263, 17
      %s267 = sadd.s32 %s265, %s266
      %s268 = smul.addr %s267, 8
      %s269 = scalar_lea.vmem %s2, %s268
      %p270 = scmp.lt.s32.totalorder %s21, 1
      %s271 = scalar_select %p270, %s21, 1
      %p272 = scmp.lt.s32.totalorder %s22, 0
      %s273 = scalar_select %p272, %s22, 0
      %s274 = smul.addr %s271, 16
      %s275 = sadd.s32 %s273, %s274
      %s276 = smul.addr %s275, 8
      %s277 = scalar_lea.vmem %s3, %s276
      %p278 = scmp.lt.s32.totalorder %s21, 1
      %s279 = scalar_select %p278, %s21, 1
      %p280 = scmp.lt.s32.totalorder %s22, 0
      %s281 = scalar_select %p280, %s22, 0
      %s282 = sadd.s32 %s281, %s279
      %s283 = scalar_lea.vmem %s4, %s282
      %p284 = scmp.lt.s32.totalorder %s21, 1
      %s285 = scalar_select %p284, %s21, 1
      %p286 = scmp.lt.s32.totalorder %s22, 0
      %s287 = scalar_select %p286, %s22, 0
      %s288 = sadd.s32 %s287, %s285
      %s289 = smul.addr %s288, 8
      %s290 = scalar_lea.vmem %s5, %s289
      %v291 = vld [vmem:[%s269] sm:$0xff]
      %v292 = vld [vmem:[%s269 + $0x8] sm:$0xff]
      %v293 = vld [vmem:[%s269 + $0x10] sm:$0xff]
      %v294 = vld [vmem:[%s269 + $0x18] sm:$0xff]
      %v295 = vld [vmem:[%s269 + $0x20] sm:$0xff]
      %v296 = vld [vmem:[%s269 + $0x28] sm:$0xff]
      %v297 = vld [vmem:[%s269 + $0x30] sm:$0xff]
      %v298 = vld [vmem:[%s269 + $0x38] sm:$0xff]
      %v299 = vld [vmem:[%s269 + $0x40] sm:$0xff]
      %v300 = vld [vmem:[%s269 + $0x48] sm:$0xff]
      %v301 = vld [vmem:[%s269 + $0x50] sm:$0xff]
      %v302 = vld [vmem:[%s269 + $0x58] sm:$0xff]
      %v303 = vld [vmem:[%s269 + $0x60] sm:$0xff]
      %v304 = vld [vmem:[%s269 + $0x68] sm:$0xff]
      %v305 = vld [vmem:[%s269 + $0x70] sm:$0xff]
      %v306 = vld [vmem:[%s269 + $0x78] sm:$0xff]
      %v307 = vld [vmem:[%s269 + $0x80] sm:$0xff]
      %v308 = vld [vmem:[%s0] sm:$0xff]
      %v309 = vld [vmem:[%s0 + $0x8] sm:$0xff]
      %v310 = vld [vmem:[%s0 + $0x10] sm:$0xff]
      %v311 = vld [vmem:[%s0 + $0x18] sm:$0xff]
      %v312 = vld [vmem:[%s0 + $0x20] sm:$0xff]
      %v313 = vld [vmem:[%s0 + $0x28] sm:$0xff]
      %v314 = vld [vmem:[%s0 + $0x30] sm:$0xff]
      %v315 = vld [vmem:[%s0 + $0x38] sm:$0xff]
      %v316 = vld [vmem:[%s0 + $0x40] sm:$0xff]
      %v317 = vld [vmem:[%s0 + $0x48] sm:$0xff]
      %v318 = vld [vmem:[%s0 + $0x50] sm:$0xff]
      %v319 = vld [vmem:[%s0 + $0x58] sm:$0xff]
      %v320 = vld [vmem:[%s0 + $0x60] sm:$0xff]
      %v321 = vld [vmem:[%s0 + $0x68] sm:$0xff]
      %v322 = vld [vmem:[%s0 + $0x70] sm:$0xff]
      %v323 = vld [vmem:[%s0 + $0x78] sm:$0xff]
      %v324 = vld [vmem:[%s0 + $0x80] sm:$0xff]
      %v325 = vld [vmem:[%s0 + $0x88] sm:$0xff]
      %v326 = vld [vmem:[%s0 + $0x90] sm:$0xff]
      %v327 = vld [vmem:[%s0 + $0x98] sm:$0xff]
      %v328 = vld [vmem:[%s0 + $0xa0] sm:$0xff]
      %v329 = vld [vmem:[%s0 + $0xa8] sm:$0xff]
      %v330 = vld [vmem:[%s0 + $0xb0] sm:$0xff]
      %v331 = vld [vmem:[%s0 + $0xb8] sm:$0xff]
      %v332 = vld [vmem:[%s0 + $0xc0] sm:$0xff]
      %v333 = vld [vmem:[%s0 + $0xc8] sm:$0xff]
      %v334 = vld [vmem:[%s0 + $0xd0] sm:$0xff]
      %v335 = vld [vmem:[%s0 + $0xd8] sm:$0xff]
      %v336 = vld [vmem:[%s0 + $0xe0] sm:$0xff]
      %v337 = vld [vmem:[%s0 + $0xe8] sm:$0xff]
      %v338 = vld [vmem:[%s0 + $0xf0] sm:$0xff]
      %v339 = vld [vmem:[%s0 + $0xf8] sm:$0xff]
      %v340 = vld [vmem:[%s0 + $0x100] sm:$0xff]
      %v341 = vld [vmem:[%s0 + $0x108] sm:$0xff]
      %v342 = vld [vmem:[%s0 + $0x110] sm:$0xff]
      %v343 = vld [vmem:[%s0 + $0x118] sm:$0xff]
      %v344 = vld [vmem:[%s0 + $0x120] sm:$0xff]
      %v345 = vld [vmem:[%s0 + $0x128] sm:$0xff]
      %v346 = vld [vmem:[%s0 + $0x130] sm:$0xff]
      %v347 = vld [vmem:[%s0 + $0x138] sm:$0xff]
      %v348 = vld [vmem:[%s0 + $0x140] sm:$0xff]
      %v349 = vld [vmem:[%s0 + $0x148] sm:$0xff]
      %v350 = vld [vmem:[%s0 + $0x150] sm:$0xff]
      %v351 = vld [vmem:[%s0 + $0x158] sm:$0xff]
      %v352 = vld [vmem:[%s0 + $0x160] sm:$0xff]
      %v353 = vld [vmem:[%s0 + $0x168] sm:$0xff]
      %v354 = vld [vmem:[%s0 + $0x170] sm:$0xff]
      %v355 = vld [vmem:[%s0 + $0x178] sm:$0xff]
      %v356 = vld [vmem:[%s0 + $0x180] sm:$0xff]
      %v357 = vld [vmem:[%s0 + $0x188] sm:$0xff]
      %v358 = vld [vmem:[%s0 + $0x190] sm:$0xff]
      %v359 = vld [vmem:[%s0 + $0x198] sm:$0xff]
      %v360 = vld [vmem:[%s0 + $0x1a0] sm:$0xff]
      %v361 = vld [vmem:[%s0 + $0x1a8] sm:$0xff]
      %v362 = vld [vmem:[%s0 + $0x1b0] sm:$0xff]
      %v363 = vld [vmem:[%s0 + $0x1b8] sm:$0xff]
      %v364 = vld [vmem:[%s0 + $0x1c0] sm:$0xff]
      %v365 = vld [vmem:[%s0 + $0x1c8] sm:$0xff]
      %v366 = vld [vmem:[%s0 + $0x1d0] sm:$0xff]
      %v367 = vld [vmem:[%s0 + $0x1d8] sm:$0xff]
      %v368 = vld [vmem:[%s0 + $0x1e0] sm:$0xff]
      %v369 = vld [vmem:[%s0 + $0x1e8] sm:$0xff]
      %v370 = vld [vmem:[%s0 + $0x1f0] sm:$0xff]
      %v371 = vld [vmem:[%s0 + $0x1f8] sm:$0xff]
      %vm372 = vcmask 64512
      %v374 = vsel %vm372, %v309, 0
      %v377 = vsel %vm372, %v311, 0
      %v380 = vsel %vm372, %v313, 0
      %v383 = vsel %vm372, %v315, 0
      %v386 = vsel %vm372, %v317, 0
      %v389 = vsel %vm372, %v319, 0
      %v392 = vsel %vm372, %v321, 0
      %v395 = vsel %vm372, %v323, 0
      %v398 = vsel %vm372, %v325, 0
      %v401 = vsel %vm372, %v327, 0
      %v404 = vsel %vm372, %v329, 0
      %v407 = vsel %vm372, %v331, 0
      %v410 = vsel %vm372, %v333, 0
      %v413 = vsel %vm372, %v335, 0
      %v416 = vsel %vm372, %v337, 0
      %v419 = vsel %vm372, %v339, 0
      %v422 = vsel %vm372, %v341, 0
      %v425 = vsel %vm372, %v343, 0
      %v428 = vsel %vm372, %v345, 0
      %v431 = vsel %vm372, %v347, 0
      %v434 = vsel %vm372, %v349, 0
      %v437 = vsel %vm372, %v351, 0
      %v440 = vsel %vm372, %v353, 0
      %v443 = vsel %vm372, %v355, 0
      %v446 = vsel %vm372, %v357, 0
      %v449 = vsel %vm372, %v359, 0
      %v452 = vsel %vm372, %v361, 0
      %v455 = vsel %vm372, %v363, 0
      %v458 = vsel %vm372, %v365, 0
      %v461 = vsel %vm372, %v367, 0
      %v464 = vsel %vm372, %v369, 0
      %v467 = vsel %vm372, %v371, 0
      %469 = vmatpush.msra.mxu0 %v306
      %470 = vmatpush.msra.mxu0 %v305
      %471 = vmatpush.msra.mxu0 %v304
      %472 = vmatpush.msra.mxu0 %v303
      %473 = vmatpush.msra.mxu0 %v302
      %474 = vmatpush.msra.mxu0 %v301
      %475 = vmatpush.msra.mxu0 %v300
      %476 = vmatpush.msra.mxu0 %v299
      %477 = vmatpush.msra.mxu0 %v298
      %478 = vmatpush.msra.mxu0 %v297
      %479 = vmatpush.msra.mxu0 %v296
      %480 = vmatpush.msra.mxu0 %v295
      %481 = vmatpush.msra.mxu0 %v294
      %482 = vmatpush.msra.mxu0 %v293
      %483 = vmatpush.msra.mxu0 %v292
      %484 = vmatpush.msra.mxu0 %v291
      %485 = vmatmul.f32.gmra.mxu0 %v308
      %v486 = vpop.f32.mrf.mxu0
      %v487 = vadd.f32 0.0, %v486
      %488 = vmatmul.f32.gmra.mxu0 %v310
      %v489 = vpop.f32.mrf.mxu0
      %v490 = vadd.f32 0.0, %v489
      %491 = vmatmul.f32.gmra.mxu0 %v312
      %v492 = vpop.f32.mrf.mxu0
      %v493 = vadd.f32 0.0, %v492
      %494 = vmatmul.f32.gmra.mxu0 %v314
      %v495 = vpop.f32.mrf.mxu0
      %v496 = vadd.f32 0.0, %v495
      %497 = vmatmul.f32.gmra.mxu0 %v316
      %v498 = vpop.f32.mrf.mxu0
      %v499 = vadd.f32 0.0, %v498
      %500 = vmatmul.f32.gmra.mxu0 %v318
      %v501 = vpop.f32.mrf.mxu0
      %v502 = vadd.f32 0.0, %v501
      %503 = vmatmul.f32.gmra.mxu0 %v320
      %v504 = vpop.f32.mrf.mxu0
      %v505 = vadd.f32 0.0, %v504
      %506 = vmatmul.f32.gmra.mxu0 %v322
      %v507 = vpop.f32.mrf.mxu0
      %v508 = vadd.f32 0.0, %v507
      %509 = vmatmul.f32.gmra.mxu0 %v324
      %v510 = vpop.f32.mrf.mxu0
      %v511 = vadd.f32 0.0, %v510
      %512 = vmatmul.f32.gmra.mxu0 %v326
      %v513 = vpop.f32.mrf.mxu0
      %v514 = vadd.f32 0.0, %v513
      %515 = vmatmul.f32.gmra.mxu0 %v328
      %v516 = vpop.f32.mrf.mxu0
      %v517 = vadd.f32 0.0, %v516
      %518 = vmatmul.f32.gmra.mxu0 %v330
      %v519 = vpop.f32.mrf.mxu0
      %v520 = vadd.f32 0.0, %v519
      %521 = vmatmul.f32.gmra.mxu0 %v332
      %v522 = vpop.f32.mrf.mxu0
      %v523 = vadd.f32 0.0, %v522
      %524 = vmatmul.f32.gmra.mxu0 %v334
      %v525 = vpop.f32.mrf.mxu0
      %v526 = vadd.f32 0.0, %v525
      %527 = vmatmul.f32.gmra.mxu0 %v336
      %v528 = vpop.f32.mrf.mxu0
      %v529 = vadd.f32 0.0, %v528
      %530 = vmatmul.f32.gmra.mxu0 %v338
      %v531 = vpop.f32.mrf.mxu0
      %v532 = vadd.f32 0.0, %v531
      %533 = vmatmul.f32.gmra.mxu0 %v340
      %v534 = vpop.f32.mrf.mxu0
      %v535 = vadd.f32 0.0, %v534
      %536 = vmatmul.f32.gmra.mxu0 %v342
      %v537 = vpop.f32.mrf.mxu0
      %v538 = vadd.f32 0.0, %v537
      %539 = vmatmul.f32.gmra.mxu0 %v344
      %v540 = vpop.f32.mrf.mxu0
      %v541 = vadd.f32 0.0, %v540
      %542 = vmatmul.f32.gmra.mxu0 %v346
      %v543 = vpop.f32.mrf.mxu0
      %v544 = vadd.f32 0.0, %v543
      %545 = vmatmul.f32.gmra.mxu0 %v348
      %v546 = vpop.f32.mrf.mxu0
      %v547 = vadd.f32 0.0, %v546
      %548 = vmatmul.f32.gmra.mxu0 %v350
      %v549 = vpop.f32.mrf.mxu0
      %v550 = vadd.f32 0.0, %v549
      %551 = vmatmul.f32.gmra.mxu0 %v352
      %v552 = vpop.f32.mrf.mxu0
      %v553 = vadd.f32 0.0, %v552
      %554 = vmatmul.f32.gmra.mxu0 %v354
      %v555 = vpop.f32.mrf.mxu0
      %v556 = vadd.f32 0.0, %v555
      %557 = vmatmul.f32.gmra.mxu0 %v356
      %v558 = vpop.f32.mrf.mxu0
      %v559 = vadd.f32 0.0, %v558
      %560 = vmatmul.f32.gmra.mxu0 %v358
      %v561 = vpop.f32.mrf.mxu0
      %v562 = vadd.f32 0.0, %v561
      %563 = vmatmul.f32.gmra.mxu0 %v360
      %v564 = vpop.f32.mrf.mxu0
      %v565 = vadd.f32 0.0, %v564
      %566 = vmatmul.f32.gmra.mxu0 %v362
      %v567 = vpop.f32.mrf.mxu0
      %v568 = vadd.f32 0.0, %v567
      %569 = vmatmul.f32.gmra.mxu0 %v364
      %v570 = vpop.f32.mrf.mxu0
      %v571 = vadd.f32 0.0, %v570
      %572 = vmatmul.f32.gmra.mxu0 %v366
      %v573 = vpop.f32.mrf.mxu0
      %v574 = vadd.f32 0.0, %v573
      %575 = vmatmul.f32.gmra.mxu0 %v368
      %v576 = vpop.f32.mrf.mxu0
      %v577 = vadd.f32 0.0, %v576
      %578 = vmatmul.f32.gmra.mxu0 %v370
      %v579 = vpop.f32.mrf.mxu0
      %v580 = vadd.f32 0.0, %v579
      %581 = vdwg.mxu0
      %582 = vmatpush.msra.mxu0 0.0
      %583 = vmatpush.msra.mxu0 0.0
      %584 = vmatpush.msra.mxu0 0.0
      %585 = vmatpush.msra.mxu0 0.0
      %586 = vmatpush.msra.mxu0 0.0
      %587 = vmatpush.msra.mxu0 0.0
      %588 = vmatpush.msra.mxu0 0.0
      %589 = vmatpush.msra.mxu0 0.0
      %590 = vmatpush.msra.mxu0 0.0
      %591 = vmatpush.msra.mxu0 0.0
      %592 = vmatpush.msra.mxu0 0.0
      %593 = vmatpush.msra.mxu0 0.0
      %594 = vmatpush.msra.mxu0 0.0
      %595 = vmatpush.msra.mxu0 0.0
      %596 = vmatpush.msra.mxu0 0.0
      %597 = vmatpush.msra.mxu0 %v307
      %598 = vmatmul.f32.gmra.mxu0 %v374
      %v599 = vpop.f32.mrf.mxu0
      %v600 = vadd.f32 %v487, %v599
      %601 = vmatmul.f32.gmra.mxu0 %v377
      %v602 = vpop.f32.mrf.mxu0
      %v603 = vadd.f32 %v490, %v602
      %604 = vmatmul.f32.gmra.mxu0 %v380
      %v605 = vpop.f32.mrf.mxu0
      %v606 = vadd.f32 %v493, %v605
      %607 = vmatmul.f32.gmra.mxu0 %v383
      %v608 = vpop.f32.mrf.mxu0
      %v609 = vadd.f32 %v496, %v608
      %610 = vmatmul.f32.gmra.mxu0 %v386
      %v611 = vpop.f32.mrf.mxu0
      %v612 = vadd.f32 %v499, %v611
      %613 = vmatmul.f32.gmra.mxu0 %v389
      %v614 = vpop.f32.mrf.mxu0
      %v615 = vadd.f32 %v502, %v614
      %616 = vmatmul.f32.gmra.mxu0 %v392
      %v617 = vpop.f32.mrf.mxu0
      %v618 = vadd.f32 %v505, %v617
      %619 = vmatmul.f32.gmra.mxu0 %v395
      %v620 = vpop.f32.mrf.mxu0
      %v621 = vadd.f32 %v508, %v620
      %622 = vmatmul.f32.gmra.mxu0 %v398
      %v623 = vpop.f32.mrf.mxu0
      %v624 = vadd.f32 %v511, %v623
      %625 = vmatmul.f32.gmra.mxu0 %v401
      %v626 = vpop.f32.mrf.mxu0
      %v627 = vadd.f32 %v514, %v626
      %628 = vmatmul.f32.gmra.mxu0 %v404
      %v629 = vpop.f32.mrf.mxu0
      %v630 = vadd.f32 %v517, %v629
      %631 = vmatmul.f32.gmra.mxu0 %v407
      %v632 = vpop.f32.mrf.mxu0
      %v633 = vadd.f32 %v520, %v632
      %634 = vmatmul.f32.gmra.mxu0 %v410
      %v635 = vpop.f32.mrf.mxu0
      %v636 = vadd.f32 %v523, %v635
      %637 = vmatmul.f32.gmra.mxu0 %v413
      %v638 = vpop.f32.mrf.mxu0
      %v639 = vadd.f32 %v526, %v638
      %640 = vmatmul.f32.gmra.mxu0 %v416
      %v641 = vpop.f32.mrf.mxu0
      %v642 = vadd.f32 %v529, %v641
      %643 = vmatmul.f32.gmra.mxu0 %v419
      %v644 = vpop.f32.mrf.mxu0
      %v645 = vadd.f32 %v532, %v644
      %646 = vmatmul.f32.gmra.mxu0 %v422
      %v647 = vpop.f32.mrf.mxu0
      %v648 = vadd.f32 %v535, %v647
      %649 = vmatmul.f32.gmra.mxu0 %v425
      %v650 = vpop.f32.mrf.mxu0
      %v651 = vadd.f32 %v538, %v650
      %652 = vmatmul.f32.gmra.mxu0 %v428
      %v653 = vpop.f32.mrf.mxu0
      %v654 = vadd.f32 %v541, %v653
      %655 = vmatmul.f32.gmra.mxu0 %v431
      %v656 = vpop.f32.mrf.mxu0
      %v657 = vadd.f32 %v544, %v656
      %658 = vmatmul.f32.gmra.mxu0 %v434
      %v659 = vpop.f32.mrf.mxu0
      %v660 = vadd.f32 %v547, %v659
      %661 = vmatmul.f32.gmra.mxu0 %v437
      %v662 = vpop.f32.mrf.mxu0
      %v663 = vadd.f32 %v550, %v662
      %664 = vmatmul.f32.gmra.mxu0 %v440
      %v665 = vpop.f32.mrf.mxu0
      %v666 = vadd.f32 %v553, %v665
      %667 = vmatmul.f32.gmra.mxu0 %v443
      %v668 = vpop.f32.mrf.mxu0
      %v669 = vadd.f32 %v556, %v668
      %670 = vmatmul.f32.gmra.mxu0 %v446
      %v671 = vpop.f32.mrf.mxu0
      %v672 = vadd.f32 %v559, %v671
      %673 = vmatmul.f32.gmra.mxu0 %v449
      %v674 = vpop.f32.mrf.mxu0
      %v675 = vadd.f32 %v562, %v674
      %676 = vmatmul.f32.gmra.mxu0 %v452
      %v677 = vpop.f32.mrf.mxu0
      %v678 = vadd.f32 %v565, %v677
      %679 = vmatmul.f32.gmra.mxu0 %v455
      %v680 = vpop.f32.mrf.mxu0
      %v681 = vadd.f32 %v568, %v680
      %682 = vmatmul.f32.gmra.mxu0 %v458
      %v683 = vpop.f32.mrf.mxu0
      %v684 = vadd.f32 %v571, %v683
      %685 = vmatmul.f32.gmra.mxu0 %v461
      %v686 = vpop.f32.mrf.mxu0
      %v687 = vadd.f32 %v574, %v686
      %688 = vmatmul.f32.gmra.mxu0 %v464
      %v689 = vpop.f32.mrf.mxu0
      %v690 = vadd.f32 %v577, %v689
      %691 = vmatmul.f32.gmra.mxu0 %v467
      %v692 = vpop.f32.mrf.mxu0
      %v693 = vadd.f32 %v580, %v692
      %694 = vdwg.mxu0
      %v695 = vmax.f32 %v600, %v612
      %v696 = vmax.f32 %v603, %v615
      %v697 = vmax.f32 %v606, %v618
      %v698 = vmax.f32 %v609, %v621
      %v699 = vmax.f32 %v695, %v624
      %v700 = vmax.f32 %v696, %v627
      %v701 = vmax.f32 %v697, %v630
      %v702 = vmax.f32 %v698, %v633
      %v703 = vmax.f32 %v699, %v636
      %v704 = vmax.f32 %v700, %v639
      %v705 = vmax.f32 %v701, %v642
      %v706 = vmax.f32 %v702, %v645
      %v707 = vmax.f32 %v703, %v648
      %v708 = vmax.f32 %v704, %v651
      %v709 = vmax.f32 %v705, %v654
      %v710 = vmax.f32 %v706, %v657
      %v711 = vmax.f32 %v707, %v660
      %v712 = vmax.f32 %v708, %v663
      %v713 = vmax.f32 %v709, %v666
      %v714 = vmax.f32 %v710, %v669
      %v715 = vmax.f32 %v711, %v672
      %v716 = vmax.f32 %v712, %v675
      %v717 = vmax.f32 %v713, %v678
      %v718 = vmax.f32 %v714, %v681
      %v719 = vmax.f32 %v715, %v684
      %v720 = vmax.f32 %v716, %v687
      %v721 = vmax.f32 %v717, %v690
      %v722 = vmax.f32 %v718, %v693
      %v723 = vmax.f32 %v719, %v720
      %v724 = vmax.f32 %v721, %v722
      %v725 = vmax.f32 %v723, %v724
      %v726 = vrot.slane %v725, 4
      %v727 = vmax.f32 %v725, %v726
      %v728 = vrot.slane %v727, 2
      %v729 = vmax.f32 %v727, %v728
      %v730 = vrot.slane %v729, 1
      %v731 = vmax.f32 %v729, %v730
      %v732 = vlaneseq
      %v733 = vshrl.u32 %v732, 7
      %v734 = vadd.s32 %v733, 8
      %v735 = vadd.s32 %v733, 16
      %v736 = vadd.s32 %v733, 24
      %v737 = vadd.s32 %v733, 32
      %v738 = vadd.s32 %v733, 40
      %v739 = vadd.s32 %v733, 48
      %v740 = vadd.s32 %v733, 56
      %v741 = vadd.s32 %v733, 64
      %v742 = vadd.s32 %v733, 72
      %v743 = vadd.s32 %v733, 80
      %v744 = vadd.s32 %v733, 88
      %v745 = vadd.s32 %v733, 96
      %v746 = vadd.s32 %v733, 104
      %v747 = vadd.s32 %v733, 112
      %v748 = vadd.s32 %v733, 120
      %v749 = vadd.s32 %v733, 128
      %v750 = vadd.s32 %v733, 136
      %v751 = vadd.s32 %v733, 144
      %v752 = vadd.s32 %v733, 152
      %v753 = vadd.s32 %v733, 160
      %v754 = vadd.s32 %v733, 168
      %v755 = vadd.s32 %v733, 176
      %v756 = vadd.s32 %v733, 184
      %v757 = vadd.s32 %v733, 192
      %v758 = vadd.s32 %v733, 200
      %v759 = vadd.s32 %v733, 208
      %v760 = vadd.s32 %v733, 216
      %v761 = vadd.s32 %v733, 224
      %v762 = vadd.s32 %v733, 232
      %v763 = vadd.s32 %v733, 240
      %v764 = vadd.s32 %v733, 248
      %v765 = vcvt.s32.f32 %v733
      %v766 = vcvt.s32.f32 %v734
      %v767 = vcvt.s32.f32 %v735
      %v768 = vcvt.s32.f32 %v736
      %v769 = vcvt.s32.f32 %v737
      %v770 = vcvt.s32.f32 %v738
      %v771 = vcvt.s32.f32 %v739
      %v772 = vcvt.s32.f32 %v740
      %v773 = vcvt.s32.f32 %v741
      %v774 = vcvt.s32.f32 %v742
      %v775 = vcvt.s32.f32 %v743
      %v776 = vcvt.s32.f32 %v744
      %v777 = vcvt.s32.f32 %v745
      %v778 = vcvt.s32.f32 %v746
      %v779 = vcvt.s32.f32 %v747
      %v780 = vcvt.s32.f32 %v748
      %v781 = vcvt.s32.f32 %v749
      %v782 = vcvt.s32.f32 %v750
      %v783 = vcvt.s32.f32 %v751
      %v784 = vcvt.s32.f32 %v752
      %v785 = vcvt.s32.f32 %v753
      %v786 = vcvt.s32.f32 %v754
      %v787 = vcvt.s32.f32 %v755
      %v788 = vcvt.s32.f32 %v756
      %v789 = vcvt.s32.f32 %v757
      %v790 = vcvt.s32.f32 %v758
      %v791 = vcvt.s32.f32 %v759
      %v792 = vcvt.s32.f32 %v760
      %v793 = vcvt.s32.f32 %v761
      %v794 = vcvt.s32.f32 %v762
      %v795 = vcvt.s32.f32 %v763
      %v796 = vcvt.s32.f32 %v764
      %vm797 = vcmp.ge.f32.partialorder %v600, %v731
      %vm798 = vcmp.ge.f32.partialorder %v603, %v731
      %vm799 = vcmp.ge.f32.partialorder %v606, %v731
      %vm800 = vcmp.ge.f32.partialorder %v609, %v731
      %vm801 = vcmp.ge.f32.partialorder %v612, %v731
      %vm802 = vcmp.ge.f32.partialorder %v615, %v731
      %vm803 = vcmp.ge.f32.partialorder %v618, %v731
      %vm804 = vcmp.ge.f32.partialorder %v621, %v731
      %vm805 = vcmp.ge.f32.partialorder %v624, %v731
      %vm806 = vcmp.ge.f32.partialorder %v627, %v731
      %vm807 = vcmp.ge.f32.partialorder %v630, %v731
      %vm808 = vcmp.ge.f32.partialorder %v633, %v731
      %vm809 = vcmp.ge.f32.partialorder %v636, %v731
      %vm810 = vcmp.ge.f32.partialorder %v639, %v731
      %vm811 = vcmp.ge.f32.partialorder %v642, %v731
      %vm812 = vcmp.ge.f32.partialorder %v645, %v731
      %vm813 = vcmp.ge.f32.partialorder %v648, %v731
      %vm814 = vcmp.ge.f32.partialorder %v651, %v731
      %vm815 = vcmp.ge.f32.partialorder %v654, %v731
      %vm816 = vcmp.ge.f32.partialorder %v657, %v731
      %vm817 = vcmp.ge.f32.partialorder %v660, %v731
      %vm818 = vcmp.ge.f32.partialorder %v663, %v731
      %vm819 = vcmp.ge.f32.partialorder %v666, %v731
      %vm820 = vcmp.ge.f32.partialorder %v669, %v731
      %vm821 = vcmp.ge.f32.partialorder %v672, %v731
      %vm822 = vcmp.ge.f32.partialorder %v675, %v731
      %vm823 = vcmp.ge.f32.partialorder %v678, %v731
      %vm824 = vcmp.ge.f32.partialorder %v681, %v731
      %vm825 = vcmp.ge.f32.partialorder %v684, %v731
      %vm826 = vcmp.ge.f32.partialorder %v687, %v731
      %vm827 = vcmp.ge.f32.partialorder %v690, %v731
      %vm828 = vcmp.ge.f32.partialorder %v693, %v731
      %v829 = vsel %vm797, %v765, 256.0
      %v830 = vsel %vm798, %v766, 256.0
      %v831 = vsel %vm799, %v767, 256.0
      %v832 = vsel %vm800, %v768, 256.0
      %v833 = vsel %vm801, %v769, 256.0
      %v834 = vsel %vm802, %v770, 256.0
      %v835 = vsel %vm803, %v771, 256.0
      %v836 = vsel %vm804, %v772, 256.0
      %v837 = vsel %vm805, %v773, 256.0
      %v838 = vsel %vm806, %v774, 256.0
      %v839 = vsel %vm807, %v775, 256.0
      %v840 = vsel %vm808, %v776, 256.0
      %v841 = vsel %vm809, %v777, 256.0
      %v842 = vsel %vm810, %v778, 256.0
      %v843 = vsel %vm811, %v779, 256.0
      %v844 = vsel %vm812, %v780, 256.0
      %v845 = vsel %vm813, %v781, 256.0
      %v846 = vsel %vm814, %v782, 256.0
      %v847 = vsel %vm815, %v783, 256.0
      %v848 = vsel %vm816, %v784, 256.0
      %v849 = vsel %vm817, %v785, 256.0
      %v850 = vsel %vm818, %v786, 256.0
      %v851 = vsel %vm819, %v787, 256.0
      %v852 = vsel %vm820, %v788, 256.0
      %v853 = vsel %vm821, %v789, 256.0
      %v854 = vsel %vm822, %v790, 256.0
      %v855 = vsel %vm823, %v791, 256.0
      %v856 = vsel %vm824, %v792, 256.0
      %v857 = vsel %vm825, %v793, 256.0
      %v858 = vsel %vm826, %v794, 256.0
      %v859 = vsel %vm827, %v795, 256.0
      %v860 = vsel %vm828, %v796, 256.0
      %v861 = vmin.f32 %v829, %v833
      %v862 = vmin.f32 %v830, %v834
      %v863 = vmin.f32 %v831, %v835
      %v864 = vmin.f32 %v832, %v836
      %v865 = vmin.f32 %v861, %v837
      %v866 = vmin.f32 %v862, %v838
      %v867 = vmin.f32 %v863, %v839
      %v868 = vmin.f32 %v864, %v840
      %v869 = vmin.f32 %v865, %v841
      %v870 = vmin.f32 %v866, %v842
      %v871 = vmin.f32 %v867, %v843
      %v872 = vmin.f32 %v868, %v844
      %v873 = vmin.f32 %v869, %v845
      %v874 = vmin.f32 %v870, %v846
      %v875 = vmin.f32 %v871, %v847
      %v876 = vmin.f32 %v872, %v848
      %v877 = vmin.f32 %v873, %v849
      %v878 = vmin.f32 %v874, %v850
      %v879 = vmin.f32 %v875, %v851
      %v880 = vmin.f32 %v876, %v852
      %v881 = vmin.f32 %v877, %v853
      %v882 = vmin.f32 %v878, %v854
      %v883 = vmin.f32 %v879, %v855
      %v884 = vmin.f32 %v880, %v856
      %v885 = vmin.f32 %v881, %v857
      %v886 = vmin.f32 %v882, %v858
      %v887 = vmin.f32 %v883, %v859
      %v888 = vmin.f32 %v884, %v860
      %v889 = vmin.f32 %v885, %v886
      %v890 = vmin.f32 %v887, %v888
      %v891 = vmin.f32 %v889, %v890
      %v892 = vrot.slane %v891, 4
      %v893 = vmin.f32 %v891, %v892
      %v894 = vrot.slane %v893, 2
      %v895 = vmin.f32 %v893, %v894
      %v896 = vrot.slane %v895, 1
      %v897 = vmin.f32 %v895, %v896
      %v898 = vcvt.f32.s32.to.zero.pseudo %v897
      %899 = vst [vmem:[%s283] sm:$0x1] %v898
      %v900 = vld [vmem:[%s1] sm:$0xff]
      %v901 = vld [vmem:[%s1 + $0x8] sm:$0xff]
      %v902 = vld [vmem:[%s1 + $0x10] sm:$0xff]
      %v903 = vld [vmem:[%s1 + $0x18] sm:$0xff]
      %v904 = vld [vmem:[%s1 + $0x20] sm:$0xff]
      %v905 = vld [vmem:[%s1 + $0x28] sm:$0xff]
      %v906 = vld [vmem:[%s1 + $0x30] sm:$0xff]
      %v907 = vld [vmem:[%s1 + $0x38] sm:$0xff]
      %v908 = vld [vmem:[%s1 + $0x40] sm:$0xff]
      %v909 = vld [vmem:[%s1 + $0x48] sm:$0xff]
      %v910 = vld [vmem:[%s1 + $0x50] sm:$0xff]
      %v911 = vld [vmem:[%s1 + $0x58] sm:$0xff]
      %v912 = vld [vmem:[%s1 + $0x60] sm:$0xff]
      %v913 = vld [vmem:[%s1 + $0x68] sm:$0xff]
      %v914 = vld [vmem:[%s1 + $0x70] sm:$0xff]
      %v915 = vld [vmem:[%s1 + $0x78] sm:$0xff]
      %v916 = vld [vmem:[%s1 + $0x80] sm:$0xff]
      %v917 = vld [vmem:[%s1 + $0x88] sm:$0xff]
      %v918 = vld [vmem:[%s1 + $0x90] sm:$0xff]
      %v919 = vld [vmem:[%s1 + $0x98] sm:$0xff]
      %v920 = vld [vmem:[%s1 + $0xa0] sm:$0xff]
      %v921 = vld [vmem:[%s1 + $0xa8] sm:$0xff]
      %v922 = vld [vmem:[%s1 + $0xb0] sm:$0xff]
      %v923 = vld [vmem:[%s1 + $0xb8] sm:$0xff]
      %v924 = vld [vmem:[%s1 + $0xc0] sm:$0xff]
      %v925 = vld [vmem:[%s1 + $0xc8] sm:$0xff]
      %v926 = vld [vmem:[%s1 + $0xd0] sm:$0xff]
      %v927 = vld [vmem:[%s1 + $0xd8] sm:$0xff]
      %v928 = vld [vmem:[%s1 + $0xe0] sm:$0xff]
      %v929 = vld [vmem:[%s1 + $0xe8] sm:$0xff]
      %v930 = vld [vmem:[%s1 + $0xf0] sm:$0xff]
      %v931 = vld [vmem:[%s1 + $0xf8] sm:$0xff]
      %vm932 = vcmp.eq.f32.partialorder %v765, %v897
      %vm933 = vcmp.eq.f32.partialorder %v766, %v897
      %vm934 = vcmp.eq.f32.partialorder %v767, %v897
      %vm935 = vcmp.eq.f32.partialorder %v768, %v897
      %vm936 = vcmp.eq.f32.partialorder %v769, %v897
      %vm937 = vcmp.eq.f32.partialorder %v770, %v897
      %vm938 = vcmp.eq.f32.partialorder %v771, %v897
      %vm939 = vcmp.eq.f32.partialorder %v772, %v897
      %vm940 = vcmp.eq.f32.partialorder %v773, %v897
      %vm941 = vcmp.eq.f32.partialorder %v774, %v897
      %vm942 = vcmp.eq.f32.partialorder %v775, %v897
      %vm943 = vcmp.eq.f32.partialorder %v776, %v897
      %vm944 = vcmp.eq.f32.partialorder %v777, %v897
      %vm945 = vcmp.eq.f32.partialorder %v778, %v897
      %vm946 = vcmp.eq.f32.partialorder %v779, %v897
      %vm947 = vcmp.eq.f32.partialorder %v780, %v897
      %vm948 = vcmp.eq.f32.partialorder %v781, %v897
      %vm949 = vcmp.eq.f32.partialorder %v782, %v897
      %vm950 = vcmp.eq.f32.partialorder %v783, %v897
      %vm951 = vcmp.eq.f32.partialorder %v784, %v897
      %vm952 = vcmp.eq.f32.partialorder %v785, %v897
      %vm953 = vcmp.eq.f32.partialorder %v786, %v897
      %vm954 = vcmp.eq.f32.partialorder %v787, %v897
      %vm955 = vcmp.eq.f32.partialorder %v788, %v897
      %vm956 = vcmp.eq.f32.partialorder %v789, %v897
      %vm957 = vcmp.eq.f32.partialorder %v790, %v897
      %vm958 = vcmp.eq.f32.partialorder %v791, %v897
      %vm959 = vcmp.eq.f32.partialorder %v792, %v897
      %vm960 = vcmp.eq.f32.partialorder %v793, %v897
      %vm961 = vcmp.eq.f32.partialorder %v794, %v897
      %vm962 = vcmp.eq.f32.partialorder %v795, %v897
      %vm963 = vcmp.eq.f32.partialorder %v796, %v897
      %v964 = vsel %vm932, 1, 0
      %v965 = vsel %vm933, 1, 0
      %v966 = vsel %vm934, 1, 0
      %v967 = vsel %vm935, 1, 0
      %v968 = vsel %vm936, 1, 0
      %v969 = vsel %vm937, 1, 0
      %v970 = vsel %vm938, 1, 0
      %v971 = vsel %vm939, 1, 0
      %v972 = vsel %vm940, 1, 0
      %v973 = vsel %vm941, 1, 0
      %v974 = vsel %vm942, 1, 0
      %v975 = vsel %vm943, 1, 0
      %v976 = vsel %vm944, 1, 0
      %v977 = vsel %vm945, 1, 0
      %v978 = vsel %vm946, 1, 0
      %v979 = vsel %vm947, 1, 0
      %v980 = vsel %vm948, 1, 0
      %v981 = vsel %vm949, 1, 0
      %v982 = vsel %vm950, 1, 0
      %v983 = vsel %vm951, 1, 0
      %v984 = vsel %vm952, 1, 0
      %v985 = vsel %vm953, 1, 0
      %v986 = vsel %vm954, 1, 0
      %v987 = vsel %vm955, 1, 0
      %v988 = vsel %vm956, 1, 0
      %v989 = vsel %vm957, 1, 0
      %v990 = vsel %vm958, 1, 0
      %v991 = vsel %vm959, 1, 0
      %v992 = vsel %vm960, 1, 0
      %v993 = vsel %vm961, 1, 0
      %v994 = vsel %vm962, 1, 0
      %v995 = vsel %vm963, 1, 0
      %v996 = vcvt.s32.f32 %v964
      %v997 = vcvt.s32.f32 %v965
      %v998 = vcvt.s32.f32 %v966
      %v999 = vcvt.s32.f32 %v967
      %v1000 = vcvt.s32.f32 %v968
      %v1001 = vcvt.s32.f32 %v969
      %v1002 = vcvt.s32.f32 %v970
      %v1003 = vcvt.s32.f32 %v971
      %v1004 = vcvt.s32.f32 %v972
      %v1005 = vcvt.s32.f32 %v973
      %v1006 = vcvt.s32.f32 %v974
      %v1007 = vcvt.s32.f32 %v975
      %v1008 = vcvt.s32.f32 %v976
      %v1009 = vcvt.s32.f32 %v977
      %v1010 = vcvt.s32.f32 %v978
      %v1011 = vcvt.s32.f32 %v979
      %v1012 = vcvt.s32.f32 %v980
      %v1013 = vcvt.s32.f32 %v981
      %v1014 = vcvt.s32.f32 %v982
      %v1015 = vcvt.s32.f32 %v983
      %v1016 = vcvt.s32.f32 %v984
      %v1017 = vcvt.s32.f32 %v985
      %v1018 = vcvt.s32.f32 %v986
      %v1019 = vcvt.s32.f32 %v987
      %v1020 = vcvt.s32.f32 %v988
      %v1021 = vcvt.s32.f32 %v989
      %v1022 = vcvt.s32.f32 %v990
      %v1023 = vcvt.s32.f32 %v991
      %v1024 = vcvt.s32.f32 %v992
      %v1025 = vcvt.s32.f32 %v993
      %v1026 = vcvt.s32.f32 %v994
      %v1027 = vcvt.s32.f32 %v995
      %1028 = vmatpush.msra.mxu0 %v1011
      %1029 = vmatpush.msra.mxu0 %v1010
      %1030 = vmatpush.msra.mxu0 %v1009
      %1031 = vmatpush.msra.mxu0 %v1008
      %1032 = vmatpush.msra.mxu0 %v1007
      %1033 = vmatpush.msra.mxu0 %v1006
      %1034 = vmatpush.msra.mxu0 %v1005
      %1035 = vmatpush.msra.mxu0 %v1004
      %1036 = vmatpush.msra.mxu0 %v1003
      %1037 = vmatpush.msra.mxu0 %v1002
      %1038 = vmatpush.msra.mxu0 %v1001
      %1039 = vmatpush.msra.mxu0 %v1000
      %1040 = vmatpush.msra.mxu0 %v999
      %1041 = vmatpush.msra.mxu0 %v998
      %1042 = vmatpush.msra.mxu0 %v997
      %1043 = vmatpush.msra.mxu0 %v996
      %1044 = vmatmul.f32.gmra.mxu0 %v900
      %v1045 = vpop.f32.mrf.mxu0
      %v1046 = vadd.f32 0.0, %v1045
      %1047 = vmatmul.f32.gmra.mxu0 %v902
      %v1048 = vpop.f32.mrf.mxu0
      %v1049 = vadd.f32 0.0, %v1048
      %1050 = vmatmul.f32.gmra.mxu0 %v904
      %v1051 = vpop.f32.mrf.mxu0
      %v1052 = vadd.f32 0.0, %v1051
      %1053 = vmatmul.f32.gmra.mxu0 %v906
      %v1054 = vpop.f32.mrf.mxu0
      %v1055 = vadd.f32 0.0, %v1054
      %1056 = vmatmul.f32.gmra.mxu0 %v908
      %v1057 = vpop.f32.mrf.mxu0
      %v1058 = vadd.f32 0.0, %v1057
      %1059 = vmatmul.f32.gmra.mxu0 %v910
      %v1060 = vpop.f32.mrf.mxu0
      %v1061 = vadd.f32 0.0, %v1060
      %1062 = vmatmul.f32.gmra.mxu0 %v912
      %v1063 = vpop.f32.mrf.mxu0
      %v1064 = vadd.f32 0.0, %v1063
      %1065 = vmatmul.f32.gmra.mxu0 %v914
      %v1066 = vpop.f32.mrf.mxu0
      %v1067 = vadd.f32 0.0, %v1066
      %1068 = vmatmul.f32.gmra.mxu0 %v916
      %v1069 = vpop.f32.mrf.mxu0
      %v1070 = vadd.f32 0.0, %v1069
      %1071 = vmatmul.f32.gmra.mxu0 %v918
      %v1072 = vpop.f32.mrf.mxu0
      %v1073 = vadd.f32 0.0, %v1072
      %1074 = vmatmul.f32.gmra.mxu0 %v920
      %v1075 = vpop.f32.mrf.mxu0
      %v1076 = vadd.f32 0.0, %v1075
      %1077 = vmatmul.f32.gmra.mxu0 %v922
      %v1078 = vpop.f32.mrf.mxu0
      %v1079 = vadd.f32 0.0, %v1078
      %1080 = vmatmul.f32.gmra.mxu0 %v924
      %v1081 = vpop.f32.mrf.mxu0
      %v1082 = vadd.f32 0.0, %v1081
      %1083 = vmatmul.f32.gmra.mxu0 %v926
      %v1084 = vpop.f32.mrf.mxu0
      %v1085 = vadd.f32 0.0, %v1084
      %1086 = vmatmul.f32.gmra.mxu0 %v928
      %v1087 = vpop.f32.mrf.mxu0
      %v1088 = vadd.f32 0.0, %v1087
      %1089 = vmatmul.f32.gmra.mxu0 %v930
      %v1090 = vpop.f32.mrf.mxu0
      %v1091 = vadd.f32 0.0, %v1090
      %1092 = vdwg.mxu0
      %1093 = vmatpush.msra.mxu0 %v1027
      %1094 = vmatpush.msra.mxu0 %v1026
      %1095 = vmatpush.msra.mxu0 %v1025
      %1096 = vmatpush.msra.mxu0 %v1024
      %1097 = vmatpush.msra.mxu0 %v1023
      %1098 = vmatpush.msra.mxu0 %v1022
      %1099 = vmatpush.msra.mxu0 %v1021
      %1100 = vmatpush.msra.mxu0 %v1020
      %1101 = vmatpush.msra.mxu0 %v1019
      %1102 = vmatpush.msra.mxu0 %v1018
      %1103 = vmatpush.msra.mxu0 %v1017
      %1104 = vmatpush.msra.mxu0 %v1016
      %1105 = vmatpush.msra.mxu0 %v1015
      %1106 = vmatpush.msra.mxu0 %v1014
      %1107 = vmatpush.msra.mxu0 %v1013
      %1108 = vmatpush.msra.mxu0 %v1012
      %1109 = vmatmul.f32.gmra.mxu0 %v901
      %v1110 = vpop.f32.mrf.mxu0
      %v1111 = vadd.f32 %v1046, %v1110
      %1112 = vmatmul.f32.gmra.mxu0 %v903
      %v1113 = vpop.f32.mrf.mxu0
      %v1114 = vadd.f32 %v1049, %v1113
      %1115 = vmatmul.f32.gmra.mxu0 %v905
      %v1116 = vpop.f32.mrf.mxu0
      %v1117 = vadd.f32 %v1052, %v1116
      %1118 = vmatmul.f32.gmra.mxu0 %v907
      %v1119 = vpop.f32.mrf.mxu0
      %v1120 = vadd.f32 %v1055, %v1119
      %1121 = vmatmul.f32.gmra.mxu0 %v909
      %v1122 = vpop.f32.mrf.mxu0
      %v1123 = vadd.f32 %v1058, %v1122
      %1124 = vmatmul.f32.gmra.mxu0 %v911
      %v1125 = vpop.f32.mrf.mxu0
      %v1126 = vadd.f32 %v1061, %v1125
      %1127 = vmatmul.f32.gmra.mxu0 %v913
      %v1128 = vpop.f32.mrf.mxu0
      %v1129 = vadd.f32 %v1064, %v1128
      %1130 = vmatmul.f32.gmra.mxu0 %v915
      %v1131 = vpop.f32.mrf.mxu0
      %v1132 = vadd.f32 %v1067, %v1131
      %1133 = vmatmul.f32.gmra.mxu0 %v917
      %v1134 = vpop.f32.mrf.mxu0
      %v1135 = vadd.f32 %v1070, %v1134
      %1136 = vmatmul.f32.gmra.mxu0 %v919
      %v1137 = vpop.f32.mrf.mxu0
      %v1138 = vadd.f32 %v1073, %v1137
      %1139 = vmatmul.f32.gmra.mxu0 %v921
      %v1140 = vpop.f32.mrf.mxu0
      %v1141 = vadd.f32 %v1076, %v1140
      %1142 = vmatmul.f32.gmra.mxu0 %v923
      %v1143 = vpop.f32.mrf.mxu0
      %v1144 = vadd.f32 %v1079, %v1143
      %1145 = vmatmul.f32.gmra.mxu0 %v925
      %v1146 = vpop.f32.mrf.mxu0
      %v1147 = vadd.f32 %v1082, %v1146
      %1148 = vmatmul.f32.gmra.mxu0 %v927
      %v1149 = vpop.f32.mrf.mxu0
      %v1150 = vadd.f32 %v1085, %v1149
      %1151 = vmatmul.f32.gmra.mxu0 %v929
      %v1152 = vpop.f32.mrf.mxu0
      %v1153 = vadd.f32 %v1088, %v1152
      %1154 = vmatmul.f32.gmra.mxu0 %v931
      %v1155 = vpop.f32.mrf.mxu0
      %v1156 = vadd.f32 %v1091, %v1155
      %1157 = vdwg.mxu0
      %1158 = vst [vmem:[%s277] sm:$0xff] %v1111
      %1159 = vst [vmem:[%s277 + $0x8] sm:$0xff] %v1114
      %1160 = vst [vmem:[%s277 + $0x10] sm:$0xff] %v1117
      %1161 = vst [vmem:[%s277 + $0x18] sm:$0xff] %v1120
      %1162 = vst [vmem:[%s277 + $0x20] sm:$0xff] %v1123
      %1163 = vst [vmem:[%s277 + $0x28] sm:$0xff] %v1126
      %1164 = vst [vmem:[%s277 + $0x30] sm:$0xff] %v1129
      %1165 = vst [vmem:[%s277 + $0x38] sm:$0xff] %v1132
      %1166 = vst [vmem:[%s277 + $0x40] sm:$0xff] %v1135
      %1167 = vst [vmem:[%s277 + $0x48] sm:$0xff] %v1138
      %1168 = vst [vmem:[%s277 + $0x50] sm:$0xff] %v1141
      %1169 = vst [vmem:[%s277 + $0x58] sm:$0xff] %v1144
      %1170 = vst [vmem:[%s277 + $0x60] sm:$0xff] %v1147
      %1171 = vst [vmem:[%s277 + $0x68] sm:$0xff] %v1150
      %1172 = vst [vmem:[%s277 + $0x70] sm:$0xff] %v1153
      %1173 = vst [vmem:[%s277 + $0x78] sm:$0xff] %v1156
      %v1174 = vsub.f32 %v1111, %v291
      %v1175 = vsub.f32 %v1114, %v292
      %v1176 = vsub.f32 %v1117, %v293
      %v1177 = vsub.f32 %v1120, %v294
      %v1178 = vsub.f32 %v1123, %v295
      %v1179 = vsub.f32 %v1126, %v296
      %v1180 = vsub.f32 %v1129, %v297
      %v1181 = vsub.f32 %v1132, %v298
      %v1182 = vsub.f32 %v1135, %v299
      %v1183 = vsub.f32 %v1138, %v300
      %v1184 = vsub.f32 %v1141, %v301
      %v1185 = vsub.f32 %v1144, %v302
      %v1186 = vsub.f32 %v1147, %v303
      %v1187 = vsub.f32 %v1150, %v304
      %v1188 = vsub.f32 %v1153, %v305
      %v1189 = vsub.f32 %v1156, %v306
      %v1190 = vmul.f32 %v1174, %v1174
      %v1191 = vmul.f32 %v1175, %v1175
      %v1192 = vmul.f32 %v1176, %v1176
      %v1193 = vmul.f32 %v1177, %v1177
      %v1194 = vmul.f32 %v1178, %v1178
      %v1195 = vmul.f32 %v1179, %v1179
      %v1196 = vmul.f32 %v1180, %v1180
      %v1197 = vmul.f32 %v1181, %v1181
      %v1198 = vmul.f32 %v1182, %v1182
      %v1199 = vmul.f32 %v1183, %v1183
      %v1200 = vmul.f32 %v1184, %v1184
      %v1201 = vmul.f32 %v1185, %v1185
      %v1202 = vmul.f32 %v1186, %v1186
      %v1203 = vmul.f32 %v1187, %v1187
      %v1204 = vmul.f32 %v1188, %v1188
      %v1205 = vmul.f32 %v1189, %v1189
      %v1206 = vlaneseq
      %v1207 = vand.u32 %v1206, 127
      %s1208 = smul.u32 %s22, 128
      %v1209 = vstv %s1208
      %v1210 = vadd.s32 %v1209, %v1207
      %vm1211 = vcmp.lt.s32.totalorder %v1210, 100
      %v1212 = vsel %vm1211, 1, 0
      %vm1213 = vcmp.eq.s32.totalorder %v1212, 1
      %v1214 = vsel %vm1213, %v1190, 0.0
      %v1215 = vsel %vm1213, %v1191, 0.0
      %v1216 = vsel %vm1213, %v1192, 0.0
      %v1217 = vsel %vm1213, %v1193, 0.0
      %v1218 = vsel %vm1213, %v1194, 0.0
      %v1219 = vsel %vm1213, %v1195, 0.0
      %v1220 = vsel %vm1213, %v1196, 0.0
      %v1221 = vsel %vm1213, %v1197, 0.0
      %v1222 = vsel %vm1213, %v1198, 0.0
      %v1223 = vsel %vm1213, %v1199, 0.0
      %v1224 = vsel %vm1213, %v1200, 0.0
      %v1225 = vsel %vm1213, %v1201, 0.0
      %v1226 = vsel %vm1213, %v1202, 0.0
      %v1227 = vsel %vm1213, %v1203, 0.0
      %v1228 = vsel %vm1213, %v1204, 0.0
      %v1229 = vsel %vm1213, %v1205, 0.0
      %v1230 = vadd.f32 %v1214, %v1215
      %v1231 = vadd.f32 %v1230, %v1216
      %v1232 = vadd.f32 %v1231, %v1217
      %v1233 = vadd.f32 %v1232, %v1218
      %v1234 = vadd.f32 %v1233, %v1219
      %v1235 = vadd.f32 %v1234, %v1220
      %v1236 = vadd.f32 %v1235, %v1221
      %v1237 = vadd.f32 %v1236, %v1222
      %v1238 = vadd.f32 %v1237, %v1223
      %v1239 = vadd.f32 %v1238, %v1224
      %v1240 = vadd.f32 %v1239, %v1225
      %v1241 = vadd.f32 %v1240, %v1226
      %v1242 = vadd.f32 %v1241, %v1227
      %v1243 = vadd.f32 %v1242, %v1228
      %v1244 = vadd.f32 %v1243, %v1229
      %v1245 = vrot.slane %v1244, 4
      %v1246 = vadd.f32 %v1244, %v1245
      %v1247 = vrot.slane %v1246, 2
      %v1248 = vadd.f32 %v1246, %v1247
      %v1249 = vrot.slane %v1248, 1
      %v1250 = vadd.f32 %v1248, %v1249
      %1251 = vadd.xlane.f32.xlu0 %v1250
      %v1252 = vpop.xlane.xlu0 %1251
      %1253 = vst [vmem:[%s290] sm:$0xff] %v1252
      %p1254 = scmp.lt.s32.totalorder %s21, 1
      %s1255 = scalar_select %p1254, %s21, 1
      %p1256 = scmp.lt.s32.totalorder %s22, 0
      %s1257 = scalar_select %p1256, %s22, 0
      %s1258 = smul.addr %s1255, 16
      %s1259 = sadd.s32 %s1257, %s1258
      %s1260 = smul.addr %s1259, 8
      %s1261 = scalar_lea.vmem %s3, %s1260
      %p1262 = scmp.lt.s32.totalorder %s21, 1
      %s1263 = scalar_select %p1262, %s21, 1
      %p1264 = scmp.lt.s32.totalorder %s22, 0
      %s1265 = scalar_select %p1264, %s22, 0
      %s1266 = sadd.s32 %s1265, %s1263
      %s1267 = scalar_lea.vmem %s4, %s1266
      %p1268 = scmp.lt.s32.totalorder %s21, 1
      %s1269 = scalar_select %p1268, %s21, 1
      %p1270 = scmp.lt.s32.totalorder %s22, 0
      %s1271 = scalar_select %p1270, %s22, 0
      %s1272 = sadd.s32 %s1271, %s1269
      %s1273 = smul.addr %s1272, 8
      %s1274 = scalar_lea.vmem %s5, %s1273
      // Predicated region
      $region33: #{_forward_impl.1} parent=31 // pred_check
        %p1275 = pneg %p119
      $region34: #{_forward_impl.1} parent=31 // pred_check_branch
        %1277 = sbr.rel (%p1275) target = $region36
      $region35: #{_forward_impl.1} parent=31 // pred_region
        _
      $region36: #{_forward_impl.1} parent=31 // pred_fallthru
        _
      // Predicated region
      $region37: #{_forward_impl.1} parent=31 // pred_check
        %p1278 = pneg %p147
      $region38: #{_forward_impl.1} parent=31 // pred_check_branch
        %1280 = sbr.rel (%p1278) target = $region40
      $region39: #{_forward_impl.1} parent=31 // pred_region
        _
      $region40: #{_forward_impl.1} parent=31 // pred_fallthru
        _
      // Predicated region
      $region41: #{_forward_impl.1} parent=31 // pred_check
        %p1281 = pneg %p175
      $region42: #{_forward_impl.1} parent=31 // pred_check_branch
        %1283 = sbr.rel (%p1281) target = $region44
      $region43: #{_forward_impl.1} parent=31 // pred_region
        _
      $region44: #{_forward_impl.1} parent=31 // pred_fallthru
        _
    $region32: #{_forward_impl.1} parent=5 // pred_fallthru
      _
    %p1284 = scmp.le.s32.totalorder 2, %s12
    // Predicated region
    $region45: #{_forward_impl.1} parent=5 // pred_check
      %p1285 = pneg %p1284
    $region46: #{_forward_impl.1} parent=5 // pred_check_branch
      %1287 = sbr.rel (%p1285) target = $region48
    $region47: #{_forward_impl.1} parent=5 // pred_region
      %s1288 = ssub.s32 %s12, 2
      // Predicated region
      $region49: #{_forward_impl.1} parent=47 // pred_check
        %p1289 = pneg %p125
      $region50: #{_forward_impl.1} parent=47 // pred_check_branch
        %1291 = sbr.rel (%p1289) target = $region52
      $region51: #{_forward_impl.1} parent=47 // pred_region
        %p1292 = scmp.lt.s32.totalorder %s23, 1
        %s1293 = scalar_select %p1292, %s23, 1
        %p1294 = scmp.lt.s32.totalorder %s24, 0
        %s1295 = scalar_select %p1294, %s24, 0
        %s1296 = smul.addr %s1293, 16
        %s1297 = sadd.s32 %s1295, %s1296
        %s1298 = smul.addr %s1297, 8
        %s1299 = scalar_lea.vmem %s3, %s1298
      $region52: #{_forward_impl.1} parent=47 // pred_fallthru
        _
      // Predicated region
      $region53: #{_forward_impl.1} parent=47 // pred_check
        %p1300 = pneg %p153
      $region54: #{_forward_impl.1} parent=47 // pred_check_branch
        %1302 = sbr.rel (%p1300) target = $region56
      $region55: #{_forward_impl.1} parent=47 // pred_region
        %p1303 = scmp.lt.s32.totalorder %s23, 1
        %s1304 = scalar_select %p1303, %s23, 1
        %p1305 = scmp.lt.s32.totalorder %s24, 0
        %s1306 = scalar_select %p1305, %s24, 0
        %s1307 = sadd.s32 %s1306, %s1304
        %s1308 = scalar_lea.vmem %s4, %s1307
      $region56: #{_forward_impl.1} parent=47 // pred_fallthru
        _
      // Predicated region
      $region57: #{_forward_impl.1} parent=47 // pred_check
        %p1309 = pneg %p181
      $region58: #{_forward_impl.1} parent=47 // pred_check_branch
        %1311 = sbr.rel (%p1309) target = $region60
      $region59: #{_forward_impl.1} parent=47 // pred_region
        %p1312 = scmp.lt.s32.totalorder %s23, 1
        %s1313 = scalar_select %p1312, %s23, 1
        %p1314 = scmp.lt.s32.totalorder %s24, 0
        %s1315 = scalar_select %p1314, %s24, 0
        %s1316 = sadd.s32 %s1315, %s1313
        %s1317 = smul.addr %s1316, 8
        %s1318 = scalar_lea.vmem %s5, %s1317
      $region60: #{_forward_impl.1} parent=47 // pred_fallthru
        _
    $region48: #{_forward_impl.1} parent=5 // pred_fallthru
      _
  $region6: #{_forward_impl.1} parent=0 // loop_footer
    %s16 = sadd.s32 1, %s12
  $region7: #{_forward_impl.1} parent=0 // loop_footer_branch
    %11 = sbr.rel target = $region3
  $region8: #{_forward_impl.1} parent=0 // loop_exit
    _

</llo_original>
